<compile_context>
chip_gen: v7x
topology: tpu7x:2x2x1
jax: 0.10.0
libtpu: 0.0.40
codegen_flags: <defaults>
</compile_context>

<pallas_src>
import functools

import jax
import jax.numpy as jnp
import numpy as np
from jax import lax
from jax.experimental import pallas as pl
from jax.experimental.pallas import tpu as pltpu


# Contract dim 0 of LHS with dim 0 of RHS ("TN" matmul) -> row-major result.
_TN_DIM_NUMBERS = (((0,), (0,)), ((), ()))


def _round_up(n, m):
    return ((n + m - 1) // m) * m


def _pick_block_batch(B, cap=8):
    """Largest divisor of B not exceeding cap (images per grid step)."""
    bt = min(B, cap)
    while B % bt:
        bt -= 1
    return bt


def _pipnet_kernel(x_ref, w1_ref, b1_ref, w2_ref, b2_ref, out_ref, *, is_count, bt):
    # x_ref : (Bt, C, HW) f32   -- channels-major, exactly as stored in NCHW HBM
    # w1_ref: (C, F_pad)  bf16  (resident)
    # b1_ref: (1, F_pad)  f32   (lane-dense row)
    # w2_ref: (F_pad, P_pad) bf16 (resident)
    # b2_ref: (1, P_pad)  f32   (padded prototypes hold -1e30)
    w1 = w1_ref[...]
    b1 = b1_ref[...]
    w2 = w2_ref[...]
    b2 = b2_ref[...]

    # Statically unrolled per-image loop (Bt is small and static).
    for i in range(bt):
        # In-kernel bf16 cast: no wrapper-side HBM cast pass.
        x_i = x_ref[i].astype(jnp.bfloat16)                            # (C, HW)

        # Backbone 1x1 conv, TN on the tiny K=C contraction -> row-major h.
        # (Real backbones should present K >= 128; accepted for the stand-in.)
        h = lax.dot_general(x_i, w1, dimension_numbers=_TN_DIM_NUMBERS,
                            preferred_element_type=jnp.float32)        # (HW, F_pad) f32
        h = jnp.maximum(h + b1, 0.0)

        # Add-on 1x1 conv: plain NN MXU matmul on the dominant contraction.
        # Keep the bf16 cast adjacent to the dot so it hides under MXU latency
        # (matters on v5e where the cast is pure VPU packing work).
        s = jnp.dot(h.astype(jnp.bfloat16), w2,
                    preferred_element_type=jnp.float32)                 # (HW, P_pad) f32
        s = s + b2

        # Softmax over the prototype (lane) axis, per spatial location, f32.
        m = jnp.max(s, axis=-1, keepdims=True)
        e = jnp.exp(s - m)
        denom = jnp.sum(e, axis=-1, keepdims=True)
        # approx recip (EUP) for max-pool; exact for the summed "counts".
        p = e * pl.reciprocal(denom, approx=not is_count)               # (HW, P_pad)

        # Global spatial pooling (over sublanes).
        if is_count:
            pooled = jnp.sum(p, axis=0, keepdims=True)   # CountPIPNet "counts"
        else:
            pooled = jnp.max(p, axis=0, keepdims=True)   # PIPNet "pooled"

        out_ref[pl.ds(i, 1), :] = pooled.astype(out_ref.dtype)          # lane-dense (1, P_pad) row


@functools.partial(jax.jit, static_argnames=("is_count_pipnet",))
def pipnet_prototype_wrapper(x_nchw, w1, b1, w2, b2, *, is_count_pipnet=False):
    """x_nchw: (B, C, H, W) float32.  Returns (B, P) pooled/counts (float32)."""
    B, C, H, W = x_nchw.shape
    F = w1.shape[1]
    P = w2.shape[1]
    HW = H * W
    F_pad = _round_up(F, 128)
    P_pad = _round_up(P, 128)
    Bt = _pick_block_batch(B)

    # NCHW -> (B, C, HW) is a FREE reshape (trailing contiguous dims); no HBM
    # transpose and no wrapper-side dtype cast.
    x = x_nchw.reshape(B, C, HW)

    # Weight-side prep (tiny tensors, one-time XLA ops):
    #   - pad F and P to multiples of 128 (padded rows/cols contribute 0)
    #   - b1 as a lane-dense (1, F_pad) row
    #   - b2 padded with -1e30 so padded prototype lanes vanish under softmax
    w1p = jnp.zeros((C, F_pad), jnp.bfloat16).at[:, :F].set(w1.astype(jnp.bfloat16))
    b1r = jnp.zeros((1, F_pad), jnp.float32).at[0, :F].set(b1.reshape(-1).astype(jnp.float32))
    w2p = jnp.zeros((F_pad, P_pad), jnp.bfloat16).at[:F, :P].set(w2.astype(jnp.bfloat16))
    b2r = jnp.full((1, P_pad), -1e30, jnp.float32).at[0, :P].set(b2.reshape(-1).astype(jnp.float32))

    kernel = functools.partial(_pipnet_kernel, is_count=is_count_pipnet, bt=Bt)

    out = pl.pallas_call(
        kernel,
        out_shape=jax.ShapeDtypeStruct((B, P_pad), jnp.float32),
        grid_spec=pltpu.PrefetchScalarGridSpec(
            num_scalar_prefetch=0,
            grid=(B // Bt,),   # Bt images per step; batch axis stays "parallel"
            in_specs=[
                pl.BlockSpec((Bt, C, HW), lambda b: (b, 0, 0)),    # activations (f32, cast in-kernel)
                pl.BlockSpec((C, F_pad), lambda b: (0, 0)),        # backbone weight (resident)
                pl.BlockSpec((1, F_pad), lambda b: (0, 0)),        # backbone bias row
                pl.BlockSpec((F_pad, P_pad), lambda b: (0, 0)),    # add-on weight (resident)
                pl.BlockSpec((1, P_pad), lambda b: (0, 0)),        # add-on bias row (-1e30 padded)
            ],
            out_specs=pl.BlockSpec((Bt, P_pad), lambda b: (b, 0)),
        ),
        compiler_params=pltpu.CompilerParams(
            # "parallel" so v7x's two TensorCores can split the batch axis
            # (switch to pltpu.CORE_PARALLEL if profiling shows a single-TC run);
            # no custom vmem_limit_bytes: footprint is < 2 MiB, default limit is
            # ample and safe against v7x's 64 MiB physical VMEM.
            dimension_semantics=("parallel",),
        ),
    )(x, w1p, b1r, w2p, b2r)

    return out[:, :P]


def _reference(x_nchw, w1, b1, w2, b2, *, is_count_pipnet=False):
    """Pure-JAX reference for the synthetic PIPNet forward.

    bf16-faithful: the kernel feeds the MXU in bf16 with f32 accumulation, so
    the reference rounds the matmul inputs through bf16 and does the rest in
    f32 (a bf16 x bf16 product is exact in f32)."""
    B, C, H, W = x_nchw.shape
    bf = lambda a: a.astype(jnp.bfloat16).astype(jnp.float32)
    xr = jnp.transpose(x_nchw, (0, 2, 3, 1)).reshape(B, H * W, C)
    h = jnp.maximum(bf(xr) @ bf(w1) + b1, 0.0)
    s = bf(h) @ bf(w2) + b2
    p = jax.nn.softmax(s, axis=-1)
    return jnp.sum(p, axis=1) if is_count_pipnet else jnp.max(p, axis=1)


if __name__ == "__main__":
    # Small, deterministic synthetic setup (PyTorch-style NCHW input).
    B, C, H, W = 2, 4, 16, 16      # input
    F, P = 32, 16                  # backbone feature dim, num prototypes

    key = jax.random.PRNGKey(0)
    kx, k1, k2, k3, k4 = jax.random.split(key, 5)
    x = jax.random.normal(kx, (B, C, H, W), dtype=jnp.float32)
    w1 = jax.random.normal(k1, (C, F), dtype=jnp.float32) * 0.1
    b1 = jax.random.normal(k2, (1, F), dtype=jnp.float32) * 0.01
    w2 = jax.random.normal(k3, (F, P), dtype=jnp.float32) * 0.1
    b2 = jax.random.normal(k4, (1, P), dtype=jnp.float32) * 0.01

    # Tolerances account for the approximate (EUP) reciprocal in the max-pool
    # softmax; matmul precision is matched by the bf16-faithful reference.
    RTOL, ATOL = 2e-2, 2e-3

    # Standard PIPNet branch (is_count_pipnet=False) -> "pooled"
    pooled = jax.block_until_ready(
        pipnet_prototype_wrapper(x, w1, b1, w2, b2, is_count_pipnet=False))
    ref_pooled = _reference(x, w1, b1, w2, b2, is_count_pipnet=False)
    np.testing.assert_allclose(np.asarray(pooled), np.asarray(ref_pooled),
                               rtol=RTOL, atol=ATOL)

    # CountPIPNet branch (is_count_pipnet=True) -> "counts"
    counts = jax.block_until_ready(
        pipnet_prototype_wrapper(x, w1, b1, w2, b2, is_count_pipnet=True))
    ref_counts = _reference(x, w1, b1, w2, b2, is_count_pipnet=True)
    np.testing.assert_allclose(np.asarray(counts), np.asarray(ref_counts),
                               rtol=RTOL, atol=ATOL)

    print("KERNEL_OK")
</pallas_src>

<mosaic_0001>
module attributes {stable_mosaic.version = 11 : i64} {
  func.func @_pipnet_kernel(%arg0: i32, %arg1: memref<2x4x256xf32, #tpu.memory_space<vmem>>, %arg2: memref<4x128xbf16, #tpu.memory_space<vmem>>, %arg3: memref<1x128xf32, #tpu.memory_space<vmem>>, %arg4: memref<128x128xbf16, #tpu.memory_space<vmem>>, %arg5: memref<1x128xf32, #tpu.memory_space<vmem>>, %arg6: memref<2x128xf32, #tpu.memory_space<vmem>>) attributes {dimension_semantics = [#tpu.dimension_semantics<parallel>], iteration_bounds = array<i64: 1>, scalar_prefetch = 0 : i64, scratch_operands = 0 : i64, tpu.core_type = #tpu.core_type<tc>, window_params = [{transform_indices = @transform_0, window_bounds = array<i64: 2, 4, 256>}, {pipeline_mode = #tpu.pipeline_mode<synchronous>, transform_indices = @transform_1, window_bounds = array<i64: 4, 128>}, {pipeline_mode = #tpu.pipeline_mode<synchronous>, transform_indices = @transform_2, window_bounds = array<i64: 1, 128>}, {pipeline_mode = #tpu.pipeline_mode<synchronous>, transform_indices = @transform_3, window_bounds = array<i64: 128, 128>}, {pipeline_mode = #tpu.pipeline_mode<synchronous>, transform_indices = @transform_4, window_bounds = array<i64: 1, 128>}, {transform_indices = @transform_5, window_bounds = array<i64: 2, 128>}]} {
    %c0 = arith.constant 0 : index
    %c0_0 = arith.constant 0 : index
    %0 = vector.load %arg2[%c0, %c0_0] : memref<4x128xbf16, #tpu.memory_space<vmem>>, vector<4x128xbf16>
    %c0_1 = arith.constant 0 : index
    %c0_2 = arith.constant 0 : index
    %1 = vector.load %arg3[%c0_1, %c0_2] : memref<1x128xf32, #tpu.memory_space<vmem>>, vector<1x128xf32>
    %c0_3 = arith.constant 0 : index
    %c0_4 = arith.constant 0 : index
    %2 = vector.load %arg4[%c0_3, %c0_4] : memref<128x128xbf16, #tpu.memory_space<vmem>>, vector<128x128xbf16>
    %c0_5 = arith.constant 0 : index
    %c0_6 = arith.constant 0 : index
    %3 = vector.load %arg5[%c0_5, %c0_6] : memref<1x128xf32, #tpu.memory_space<vmem>>, vector<1x128xf32>
    %c0_7 = arith.constant 0 : index
    %c0_8 = arith.constant 0 : index
    %c0_9 = arith.constant 0 : index
    %4 = vector.load %arg1[%c0_7, %c0_8, %c0_9] : memref<2x4x256xf32, #tpu.memory_space<vmem>>, vector<1x4x256xf32>
    %5 = vector.shape_cast %4 : vector<1x4x256xf32> to vector<4x256xf32>
    %6 = arith.truncf %5 : vector<4x256xf32> to vector<4x256xbf16>
    %cst = arith.constant dense<0.000000e+00> : vector<256x128xf32>
    %7 = tpu.matmul %6, %0, %cst {dimension_numbers = #tpu.dot_dimension_numbers<[0], [0], [1], [1], [0, 1, 1, 1], [], []>} : vector<4x256xbf16>, vector<4x128xbf16>, vector<256x128xf32> -> vector<256x128xf32>
    %8 = vector.broadcast %1 : vector<1x128xf32> to vector<256x128xf32>
    %9 = arith.addf %7, %8 : vector<256x128xf32>
    %cst_10 = arith.constant 0.000000e+00 : f32
    %10 = vector.broadcast %cst_10 : f32 to vector<256x128xf32>
    %11 = arith.maximumf %9, %10 : vector<256x128xf32>
    %12 = arith.truncf %11 : vector<256x128xf32> to vector<256x128xbf16>
    %cst_11 = arith.constant dense<0.000000e+00> : vector<256x128xf32>
    %13 = tpu.matmul %12, %2, %cst_11 {dimension_numbers = #tpu.dot_dimension_numbers<[1], [0], [0], [1], [0, 0, 1, 1], [], []>} : vector<256x128xbf16>, vector<128x128xbf16>, vector<256x128xf32> -> vector<256x128xf32>
    %14 = vector.broadcast %3 : vector<1x128xf32> to vector<256x128xf32>
    %15 = arith.addf %13, %14 : vector<256x128xf32>
    %cst_12 = arith.constant dense<0xFF800000> : vector<256xf32>
    %16 = vector.multi_reduction <maximumf>, %15, %cst_12 [1] : vector<256x128xf32> to vector<256xf32>
    %17 = vector.shape_cast %16 : vector<256xf32> to vector<256x1xf32>
    %18 = vector.broadcast %17 : vector<256x1xf32> to vector<256x128xf32>
    %19 = arith.subf %15, %18 : vector<256x128xf32>
    %20 = math.exp %19 : vector<256x128xf32>
    %cst_13 = arith.constant dense<0.000000e+00> : vector<256xf32>
    %21 = vector.multi_reduction <add>, %20, %cst_13 [1] : vector<256x128xf32> to vector<256xf32>
    %22 = vector.shape_cast %21 : vector<256xf32> to vector<256x1xf32>
    %23 = tpu.reciprocal %22 {approx = true} : vector<256x1xf32> -> vector<256x1xf32>
    %24 = vector.broadcast %23 : vector<256x1xf32> to vector<256x128xf32>
    %25 = arith.mulf %20, %24 : vector<256x128xf32>
    %cst_14 = arith.constant dense<0xFF800000> : vector<128xf32>
    %26 = vector.multi_reduction <maximumf>, %25, %cst_14 [0] : vector<256x128xf32> to vector<128xf32>
    %27 = vector.shape_cast %26 : vector<128xf32> to vector<1x128xf32>
    %c0_15 = arith.constant 0 : index
    %c0_16 = arith.constant 0 : index
    %28 = vector.load %arg6[%c0_15, %c0_16] : memref<2x128xf32, #tpu.memory_space<vmem>>, vector<1x128xf32>
    tpu.vector_store %arg6[%c0_15, %c0_16], %27 {strides = array<i32>} : memref<2x128xf32, #tpu.memory_space<vmem>>, vector<1x128xf32>,
    %c1 = arith.constant 1 : index
    %c0_17 = arith.constant 0 : index
    %c0_18 = arith.constant 0 : index
    %29 = vector.load %arg1[%c1, %c0_17, %c0_18] : memref<2x4x256xf32, #tpu.memory_space<vmem>>, vector<1x4x256xf32>
    %30 = vector.shape_cast %29 : vector<1x4x256xf32> to vector<4x256xf32>
    %31 = arith.truncf %30 : vector<4x256xf32> to vector<4x256xbf16>
    %cst_19 = arith.constant dense<0.000000e+00> : vector<256x128xf32>
    %32 = tpu.matmul %31, %0, %cst_19 {dimension_numbers = #tpu.dot_dimension_numbers<[0], [0], [1], [1], [0, 1, 1, 1], [], []>} : vector<4x256xbf16>, vector<4x128xbf16>, vector<256x128xf32> -> vector<256x128xf32>
    %33 = vector.broadcast %1 : vector<1x128xf32> to vector<256x128xf32>
    %34 = arith.addf %32, %33 : vector<256x128xf32>
    %cst_20 = arith.constant 0.000000e+00 : f32
    %35 = vector.broadcast %cst_20 : f32 to vector<256x128xf32>
    %36 = arith.maximumf %34, %35 : vector<256x128xf32>
    %37 = arith.truncf %36 : vector<256x128xf32> to vector<256x128xbf16>
    %cst_21 = arith.constant dense<0.000000e+00> : vector<256x128xf32>
    %38 = tpu.matmul %37, %2, %cst_21 {dimension_numbers = #tpu.dot_dimension_numbers<[1], [0], [0], [1], [0, 0, 1, 1], [], []>} : vector<256x128xbf16>, vector<128x128xbf16>, vector<256x128xf32> -> vector<256x128xf32>
    %39 = vector.broadcast %3 : vector<1x128xf32> to vector<256x128xf32>
    %40 = arith.addf %38, %39 : vector<256x128xf32>
    %cst_22 = arith.constant dense<0xFF800000> : vector<256xf32>
    %41 = vector.multi_reduction <maximumf>, %40, %cst_22 [1] : vector<256x128xf32> to vector<256xf32>
    %42 = vector.shape_cast %41 : vector<256xf32> to vector<256x1xf32>
    %43 = vector.broadcast %42 : vector<256x1xf32> to vector<256x128xf32>
    %44 = arith.subf %40, %43 : vector<256x128xf32>
    %45 = math.exp %44 : vector<256x128xf32>
    %cst_23 = arith.constant dense<0.000000e+00> : vector<256xf32>
    %46 = vector.multi_reduction <add>, %45, %cst_23 [1] : vector<256x128xf32> to vector<256xf32>
    %47 = vector.shape_cast %46 : vector<256xf32> to vector<256x1xf32>
    %48 = tpu.reciprocal %47 {approx = true} : vector<256x1xf32> -> vector<256x1xf32>
    %49 = vector.broadcast %48 : vector<256x1xf32> to vector<256x128xf32>
    %50 = arith.mulf %45, %49 : vector<256x128xf32>
    %cst_24 = arith.constant dense<0xFF800000> : vector<128xf32>
    %51 = vector.multi_reduction <maximumf>, %50, %cst_24 [0] : vector<256x128xf32> to vector<128xf32>
    %52 = vector.shape_cast %51 : vector<128xf32> to vector<1x128xf32>
    %c1_25 = arith.constant 1 : index
    %c0_26 = arith.constant 0 : index
    %53 = vector.load %arg6[%c1_25, %c0_26] : memref<2x128xf32, #tpu.memory_space<vmem>>, vector<1x128xf32>
    tpu.vector_store %arg6[%c1_25, %c0_26], %52 {strides = array<i32>} : memref<2x128xf32, #tpu.memory_space<vmem>>, vector<1x128xf32>,
    return
  }
  func.func @transform_0(%arg0: i32) -> (i32, i32, i32) {
    %c0_i32 = arith.constant 0 : i32
    %c0_i32_0 = arith.constant 0 : i32
    %c0_i32_1 = arith.constant 0 : i32
    return %arg0, %c0_i32, %c0_i32_0 : i32, i32, i32
  }
  func.func @transform_1(%arg0: i32) -> (i32, i32) {
    %c0_i32 = arith.constant 0 : i32
    %c0_i32_0 = arith.constant 0 : i32
    %c0_i32_1 = arith.constant 0 : i32
    return %c0_i32, %c0_i32_0 : i32, i32
  }
  func.func @transform_2(%arg0: i32) -> (i32, i32) {
    %c0_i32 = arith.constant 0 : i32
    %c0_i32_0 = arith.constant 0 : i32
    %c0_i32_1 = arith.constant 0 : i32
    return %c0_i32, %c0_i32_0 : i32, i32
  }
  func.func @transform_3(%arg0: i32) -> (i32, i32) {
    %c0_i32 = arith.constant 0 : i32
    %c0_i32_0 = arith.constant 0 : i32
    %c0_i32_1 = arith.constant 0 : i32
    return %c0_i32, %c0_i32_0 : i32, i32
  }
  func.func @transform_4(%arg0: i32) -> (i32, i32) {
    %c0_i32 = arith.constant 0 : i32
    %c0_i32_0 = arith.constant 0 : i32
    %c0_i32_1 = arith.constant 0 : i32
    return %c0_i32, %c0_i32_0 : i32, i32
  }
  func.func @transform_5(%arg0: i32) -> (i32, i32) {
    %c0_i32 = arith.constant 0 : i32
    %c0_i32_0 = arith.constant 0 : i32
    return %arg0, %c0_i32 : i32, i32
  }
}

</mosaic_0001>

<llo_original>
// kernel: pipnet_prototype_wrapper.1
$region0: #{pipnet_prototype_wrapper.1}
  #allocation0 [shape = 'u32[]', space=smem, size = 0x4, offset = 0x4, fixed_abs, tag = 'smem constant byte address 0x4 - core index']
  #allocation1 [shape = 'u32[144,128]{1,0:T(1,128)}', space=vmem, size = 0x12000, scoped, tag = 'internal scratch']
  %s0 = inlined_call_operand.vmem [shape: f32[2,4,256], index: 0, kind: input, shape index: {}]
  %s1 = inlined_call_operand.vmem [shape: bf16[4,128], index: 1, kind: input, shape index: {}]
  %s2 = inlined_call_operand.vmem [shape: f32[1,128], index: 2, kind: input, shape index: {}]
  %s3 = inlined_call_operand.vmem [shape: bf16[128,128], index: 3, kind: input, shape index: {}]
  %s4 = inlined_call_operand.vmem [shape: f32[1,128], index: 4, kind: input, shape index: {}]
  %s5 = inlined_call_operand.hbm [shape: f32[2,128], index: 5, kind: output, shape index: {}]
  %s6 = sld [smem:[#allocation0]]
  $region30: #{pipnet_prototype_wrapper.1} parent=0
    _
  %s8 = ssub.s32 1, %s6
  %s9 = scalar_select 0, %s8, %s6
  $region1: #{pipnet_prototype_wrapper.1} parent=0
    #allocation2 [shape = 'u8[1024]{0}', space=vmem, size = 0x400, scoped, tag = 'output window, operand 0, single buffered']
    #allocation3 [shape = 's32[1]{0}', space=sflag, size = 0x4, scoped, tag = 'scoped memory for pipnet_prototype_wrapper.1']
    %10 = vsyncpa [#allocation3], 0
    // Predicated region
    $region2: #{pipnet_prototype_wrapper.1} parent=1 // pred_check
      _
    $region3: #{pipnet_prototype_wrapper.1} parent=1 // pred_check_branch
      %12 = sbr.rel (0) target = $region5
    $region4: #{pipnet_prototype_wrapper.1} parent=1 // pred_region
      _
    $region5: #{pipnet_prototype_wrapper.1} parent=1 // pred_fallthru
      _
    // Predicated region
    $region6: #{pipnet_prototype_wrapper.1} parent=1 // pred_check
      _
    $region7: #{pipnet_prototype_wrapper.1} parent=1 // pred_check_branch
      %14 = sbr.rel (0) target = $region9
    $region8: #{pipnet_prototype_wrapper.1} parent=1 // pred_region
      _
    $region9: #{pipnet_prototype_wrapper.1} parent=1 // pred_fallthru
      _
    // Predicated region
    $region10: #{pipnet_prototype_wrapper.1} parent=1 // pred_check
      _
    $region11: #{pipnet_prototype_wrapper.1} parent=1 // pred_check_branch
      %16 = sbr.rel (0) target = $region13
    $region12: #{pipnet_prototype_wrapper.1} parent=1 // pred_region
      _
    $region13: #{pipnet_prototype_wrapper.1} parent=1 // pred_fallthru
      _
    // Predicated region
    $region14: #{pipnet_prototype_wrapper.1} parent=1 // pred_check
      _
    $region15: #{pipnet_prototype_wrapper.1} parent=1 // pred_check_branch
      %18 = sbr.rel (0) target = $region17
    $region16: #{pipnet_prototype_wrapper.1} parent=1 // pred_region
      _
    $region17: #{pipnet_prototype_wrapper.1} parent=1 // pred_fallthru
      _
    // Predicated region
    $region18: #{pipnet_prototype_wrapper.1} parent=1 // pred_check
      _
    $region19: #{pipnet_prototype_wrapper.1} parent=1 // pred_check_branch
      %20 = sbr.rel (0) target = $region21
    $region20: #{pipnet_prototype_wrapper.1} parent=1 // pred_region
      _
    $region21: #{pipnet_prototype_wrapper.1} parent=1 // pred_fallthru
      _
    %v22 = vld [vmem:[%s1] sm:$0x3]
    %v23 = vld [vmem:[%s2] sm:$0x1]
    %v24 = vld [vmem:[%s3] sm:$0xf]
    %v25 = vld [vmem:[%s3 + $0x4] sm:$0xf]
    %v26 = vld [vmem:[%s3 + $0x8] sm:$0xf]
    %v27 = vld [vmem:[%s3 + $0xc] sm:$0xf]
    %v28 = vld [vmem:[%s3 + $0x10] sm:$0xf]
    %v29 = vld [vmem:[%s3 + $0x14] sm:$0xf]
    %v30 = vld [vmem:[%s3 + $0x18] sm:$0xf]
    %v31 = vld [vmem:[%s3 + $0x1c] sm:$0xf]
    %v32 = vld [vmem:[%s3 + $0x20] sm:$0xf]
    %v33 = vld [vmem:[%s3 + $0x24] sm:$0xf]
    %v34 = vld [vmem:[%s3 + $0x28] sm:$0xf]
    %v35 = vld [vmem:[%s3 + $0x2c] sm:$0xf]
    %v36 = vld [vmem:[%s3 + $0x30] sm:$0xf]
    %v37 = vld [vmem:[%s3 + $0x34] sm:$0xf]
    %v38 = vld [vmem:[%s3 + $0x38] sm:$0xf]
    %v39 = vld [vmem:[%s3 + $0x3c] sm:$0xf]
    %v40 = vld [vmem:[%s4] sm:$0x1]
    %v41 = vld [vmem:[%s0] sm:$0xff]
    %v43 = vcombine.high %v41, %v41
    %v45 = vpack.c.bf16 %v41, %v41
    %v46 = vpack.c.bf16 %v43, %v43
    %v48 = vlaneseq
    %v49 = vshrl.u32 %v48, 7
    %v50 = vsub.s32 0, %v49
    %v51 = vrot.slane %v23, %v50
    %53 = vxpose.xlu0.c.b16.start [1/8] %v45, 128
    %54 = vxpose.xlu0.c.b16.cont [2/8] 0, 128
    %55 = vxpose.xlu0.c.b16.cont [3/8] 0, 128
    %56 = vxpose.xlu0.c.b16.cont [4/8] 0, 128
    %57 = vxpose.xlu0.c.b16.cont [5/8] 0, 128
    %58 = vxpose.xlu0.c.b16.cont [6/8] 0, 128
    %59 = vxpose.xlu0.c.b16.cont [7/8] 0, 128
    %60 = vxpose.xlu0.c.b16.end [8/8] 0, 128
    %v61 = vpop.trf.xlu0
    %v62 = vpop.trf.xlu0
    %v63 = vpop.trf.xlu0
    %v64 = vpop.trf.xlu0
    %v65 = vpop.trf.xlu0
    %v66 = vpop.trf.xlu0
    %v67 = vpop.trf.xlu0
    %v68 = vpop.trf.xlu0
    %69 = vxpose.xlu0.c.b16.start [1/8] %v46, 128
    %70 = vxpose.xlu0.c.b16.cont [2/8] 0, 128
    %71 = vxpose.xlu0.c.b16.cont [3/8] 0, 128
    %72 = vxpose.xlu0.c.b16.cont [4/8] 0, 128
    %73 = vxpose.xlu0.c.b16.cont [5/8] 0, 128
    %74 = vxpose.xlu0.c.b16.cont [6/8] 0, 128
    %75 = vxpose.xlu0.c.b16.cont [7/8] 0, 128
    %76 = vxpose.xlu0.c.b16.end [8/8] 0, 128
    %v77 = vpop.trf.xlu0
    %v78 = vpop.trf.xlu0
    %v79 = vpop.trf.xlu0
    %v80 = vpop.trf.xlu0
    %v81 = vpop.trf.xlu0
    %v82 = vpop.trf.xlu0
    %v83 = vpop.trf.xlu0
    %v84 = vpop.trf.xlu0
    %vm85 = vcmask 31744
    %v87 = vsel %vm85, %v61, 0
    %v90 = vsel %vm85, %v62, 0
    %v93 = vsel %vm85, %v63, 0
    %v96 = vsel %vm85, %v64, 0
    %v99 = vsel %vm85, %v65, 0
    %v102 = vsel %vm85, %v66, 0
    %v105 = vsel %vm85, %v67, 0
    %v108 = vsel %vm85, %v68, 0
    %v111 = vsel %vm85, %v77, 0
    %v114 = vsel %vm85, %v78, 0
    %v117 = vsel %vm85, %v79, 0
    %v120 = vsel %vm85, %v80, 0
    %v123 = vsel %vm85, %v81, 0
    %v126 = vsel %vm85, %v82, 0
    %v129 = vsel %vm85, %v83, 0
    %v132 = vsel %vm85, %v84, 0
    %vm134 = vcmask 1041408
    %v136 = vsel %vm134, %v22, 0
    %138 = vmatprep.subr.bf16.mxu0 0
    %139 = vmatpush1.bf16.msra.mxu0 %v136
    %140 = vmatprep.subr.bf16.mxu0 0
    %141 = vmatpush1.bf16.msra.mxu0 0
    %142 = vmatprep.subr.bf16.mxu0 0
    %143 = vmatpush1.bf16.msra.mxu0 0
    %144 = vmatprep.subr.bf16.mxu0 0
    %145 = vmatpush1.bf16.msra.mxu0 0
    %146 = vmatprep.subr.bf16.mxu0 0
    %147 = vmatpush1.bf16.msra.mxu0 0
    %148 = vmatprep.subr.bf16.mxu0 0
    %149 = vmatpush1.bf16.msra.mxu0 0
    %150 = vmatprep.subr.bf16.mxu0 0
    %151 = vmatpush1.bf16.msra.mxu0 0
    %152 = vmatprep.subr.bf16.mxu0 0
    %153 = vmatpush1.bf16.msra.mxu0 0
    %154 = vmatprep.subr.bf16.mxu0 0
    %155 = vmatpush1.bf16.msra.mxu0 0
    %156 = vmatprep.subr.bf16.mxu0 0
    %157 = vmatpush1.bf16.msra.mxu0 0
    %158 = vmatprep.subr.bf16.mxu0 0
    %159 = vmatpush1.bf16.msra.mxu0 0
    %160 = vmatprep.subr.bf16.mxu0 0
    %161 = vmatpush1.bf16.msra.mxu0 0
    %162 = vmatprep.subr.bf16.mxu0 0
    %163 = vmatpush1.bf16.msra.mxu0 0
    %164 = vmatprep.subr.bf16.mxu0 0
    %165 = vmatpush1.bf16.msra.mxu0 0
    %166 = vmatprep.subr.bf16.mxu0 0
    %167 = vmatpush1.bf16.msra.mxu0 0
    %168 = vmatprep.subr.bf16.mxu0 0
    %169 = vmatpush1.bf16.msra.mxu0 0
    %170 = vmatprep.mubr.bf16.mxu0 0
    %171 = vmatmul.mubr.bf16.gmra.mrb[0].mxu0 %v87
    %v172 = vpop.f32.mrb[0].mxu0
    %v173 = vadd.f32 %v51, %v172
    %v174 = vpop.f32.mrb[0].mxu0
    %v175 = vpop.f32.mrb[0].mxu0
    %v176 = vadd.f32 %v51, %v175
    %v177 = vpop.f32.mrb[0].mxu0
    %178 = vmatprep.mubr.bf16.mxu0 0
    %179 = vmatmul.mubr.bf16.gmra.mrb[0].mxu0 %v90
    %v180 = vpop.f32.mrb[0].mxu0
    %v181 = vadd.f32 %v51, %v180
    %v182 = vpop.f32.mrb[0].mxu0
    %v183 = vpop.f32.mrb[0].mxu0
    %v184 = vadd.f32 %v51, %v183
    %v185 = vpop.f32.mrb[0].mxu0
    %186 = vmatprep.mubr.bf16.mxu0 0
    %187 = vmatmul.mubr.bf16.gmra.mrb[0].mxu0 %v93
    %v188 = vpop.f32.mrb[0].mxu0
    %v189 = vadd.f32 %v51, %v188
    %v190 = vpop.f32.mrb[0].mxu0
    %v191 = vpop.f32.mrb[0].mxu0
    %v192 = vadd.f32 %v51, %v191
    %v193 = vpop.f32.mrb[0].mxu0
    %194 = vmatprep.mubr.bf16.mxu0 0
    %195 = vmatmul.mubr.bf16.gmra.mrb[0].mxu0 %v96
    %v196 = vpop.f32.mrb[0].mxu0
    %v197 = vadd.f32 %v51, %v196
    %v198 = vpop.f32.mrb[0].mxu0
    %v199 = vpop.f32.mrb[0].mxu0
    %v200 = vadd.f32 %v51, %v199
    %v201 = vpop.f32.mrb[0].mxu0
    %202 = vmatprep.mubr.bf16.mxu0 0
    %203 = vmatmul.mubr.bf16.gmra.mrb[0].mxu0 %v99
    %v204 = vpop.f32.mrb[0].mxu0
    %v205 = vadd.f32 %v51, %v204
    %v206 = vpop.f32.mrb[0].mxu0
    %v207 = vpop.f32.mrb[0].mxu0
    %v208 = vadd.f32 %v51, %v207
    %v209 = vpop.f32.mrb[0].mxu0
    %210 = vmatprep.mubr.bf16.mxu0 0
    %211 = vmatmul.mubr.bf16.gmra.mrb[0].mxu0 %v102
    %v212 = vpop.f32.mrb[0].mxu0
    %v213 = vadd.f32 %v51, %v212
    %v214 = vpop.f32.mrb[0].mxu0
    %v215 = vpop.f32.mrb[0].mxu0
    %v216 = vadd.f32 %v51, %v215
    %v217 = vpop.f32.mrb[0].mxu0
    %218 = vmatprep.mubr.bf16.mxu0 0
    %219 = vmatmul.mubr.bf16.gmra.mrb[0].mxu0 %v105
    %v220 = vpop.f32.mrb[0].mxu0
    %v221 = vadd.f32 %v51, %v220
    %v222 = vpop.f32.mrb[0].mxu0
    %v223 = vpop.f32.mrb[0].mxu0
    %v224 = vadd.f32 %v51, %v223
    %v225 = vpop.f32.mrb[0].mxu0
    %226 = vmatprep.mubr.bf16.mxu0 0
    %227 = vmatmul.mubr.bf16.gmra.mrb[0].mxu0 %v108
    %v228 = vpop.f32.mrb[0].mxu0
    %v229 = vadd.f32 %v51, %v228
    %v230 = vpop.f32.mrb[0].mxu0
    %v231 = vpop.f32.mrb[0].mxu0
    %v232 = vadd.f32 %v51, %v231
    %v233 = vpop.f32.mrb[0].mxu0
    %234 = vmatprep.mubr.bf16.mxu0 0
    %235 = vmatmul.mubr.bf16.gmra.mrb[0].mxu0 %v111
    %v236 = vpop.f32.mrb[0].mxu0
    %v237 = vadd.f32 %v51, %v236
    %v238 = vpop.f32.mrb[0].mxu0
    %v239 = vpop.f32.mrb[0].mxu0
    %v240 = vadd.f32 %v51, %v239
    %v241 = vpop.f32.mrb[0].mxu0
    %242 = vmatprep.mubr.bf16.mxu0 0
    %243 = vmatmul.mubr.bf16.gmra.mrb[0].mxu0 %v114
    %v244 = vpop.f32.mrb[0].mxu0
    %v245 = vadd.f32 %v51, %v244
    %v246 = vpop.f32.mrb[0].mxu0
    %v247 = vpop.f32.mrb[0].mxu0
    %v248 = vadd.f32 %v51, %v247
    %v249 = vpop.f32.mrb[0].mxu0
    %250 = vmatprep.mubr.bf16.mxu0 0
    %251 = vmatmul.mubr.bf16.gmra.mrb[0].mxu0 %v117
    %v252 = vpop.f32.mrb[0].mxu0
    %v253 = vadd.f32 %v51, %v252
    %v254 = vpop.f32.mrb[0].mxu0
    %v255 = vpop.f32.mrb[0].mxu0
    %v256 = vadd.f32 %v51, %v255
    %v257 = vpop.f32.mrb[0].mxu0
    %258 = vmatprep.mubr.bf16.mxu0 0
    %259 = vmatmul.mubr.bf16.gmra.mrb[0].mxu0 %v120
    %v260 = vpop.f32.mrb[0].mxu0
    %v261 = vadd.f32 %v51, %v260
    %v262 = vpop.f32.mrb[0].mxu0
    %v263 = vpop.f32.mrb[0].mxu0
    %v264 = vadd.f32 %v51, %v263
    %v265 = vpop.f32.mrb[0].mxu0
    %266 = vmatprep.mubr.bf16.mxu0 0
    %267 = vmatmul.mubr.bf16.gmra.mrb[0].mxu0 %v123
    %v268 = vpop.f32.mrb[0].mxu0
    %v269 = vadd.f32 %v51, %v268
    %v270 = vpop.f32.mrb[0].mxu0
    %v271 = vpop.f32.mrb[0].mxu0
    %v272 = vadd.f32 %v51, %v271
    %v273 = vpop.f32.mrb[0].mxu0
    %274 = vmatprep.mubr.bf16.mxu0 0
    %275 = vmatmul.mubr.bf16.gmra.mrb[0].mxu0 %v126
    %v276 = vpop.f32.mrb[0].mxu0
    %v277 = vadd.f32 %v51, %v276
    %v278 = vpop.f32.mrb[0].mxu0
    %v279 = vpop.f32.mrb[0].mxu0
    %v280 = vadd.f32 %v51, %v279
    %v281 = vpop.f32.mrb[0].mxu0
    %282 = vmatprep.mubr.bf16.mxu0 0
    %283 = vmatmul.mubr.bf16.gmra.mrb[0].mxu0 %v129
    %v284 = vpop.f32.mrb[0].mxu0
    %v285 = vadd.f32 %v51, %v284
    %v286 = vpop.f32.mrb[0].mxu0
    %v287 = vpop.f32.mrb[0].mxu0
    %v288 = vadd.f32 %v51, %v287
    %v289 = vpop.f32.mrb[0].mxu0
    %290 = vmatprep.mubr.bf16.mxu0 0
    %291 = vmatmul.mubr.bf16.gmra.mrb[0].mxu0 %v132
    %v292 = vpop.f32.mrb[0].mxu0
    %v293 = vadd.f32 %v51, %v292
    %v294 = vpop.f32.mrb[0].mxu0
    %v295 = vpop.f32.mrb[0].mxu0
    %v296 = vadd.f32 %v51, %v295
    %v297 = vpop.f32.mrb[0].mxu0
    %298 = vdwg.mxu0
    %v299 = vmax.f32 %v173, 0.0
    %v300 = vmax.f32 %v176, 0.0
    %v301 = vmax.f32 %v181, 0.0
    %v302 = vmax.f32 %v184, 0.0
    %v303 = vmax.f32 %v189, 0.0
    %v304 = vmax.f32 %v192, 0.0
    %v305 = vmax.f32 %v197, 0.0
    %v306 = vmax.f32 %v200, 0.0
    %v307 = vmax.f32 %v205, 0.0
    %v308 = vmax.f32 %v208, 0.0
    %v309 = vmax.f32 %v213, 0.0
    %v310 = vmax.f32 %v216, 0.0
    %v311 = vmax.f32 %v221, 0.0
    %v312 = vmax.f32 %v224, 0.0
    %v313 = vmax.f32 %v229, 0.0
    %v314 = vmax.f32 %v232, 0.0
    %v315 = vmax.f32 %v237, 0.0
    %v316 = vmax.f32 %v240, 0.0
    %v317 = vmax.f32 %v245, 0.0
    %v318 = vmax.f32 %v248, 0.0
    %v319 = vmax.f32 %v253, 0.0
    %v320 = vmax.f32 %v256, 0.0
    %v321 = vmax.f32 %v261, 0.0
    %v322 = vmax.f32 %v264, 0.0
    %v323 = vmax.f32 %v269, 0.0
    %v324 = vmax.f32 %v272, 0.0
    %v325 = vmax.f32 %v277, 0.0
    %v326 = vmax.f32 %v280, 0.0
    %v327 = vmax.f32 %v285, 0.0
    %v328 = vmax.f32 %v288, 0.0
    %v329 = vmax.f32 %v293, 0.0
    %v330 = vmax.f32 %v296, 0.0
    %v331 = vpack.c.bf16 %v300, %v299
    %v332 = vpack.c.bf16 %v302, %v301
    %v333 = vpack.c.bf16 %v304, %v303
    %v334 = vpack.c.bf16 %v306, %v305
    %v335 = vpack.c.bf16 %v308, %v307
    %v336 = vpack.c.bf16 %v310, %v309
    %v337 = vpack.c.bf16 %v312, %v311
    %v338 = vpack.c.bf16 %v314, %v313
    %v339 = vpack.c.bf16 %v316, %v315
    %v340 = vpack.c.bf16 %v318, %v317
    %v341 = vpack.c.bf16 %v320, %v319
    %v342 = vpack.c.bf16 %v322, %v321
    %v343 = vpack.c.bf16 %v324, %v323
    %v344 = vpack.c.bf16 %v326, %v325
    %v345 = vpack.c.bf16 %v328, %v327
    %v346 = vpack.c.bf16 %v330, %v329
    %v348 = vlaneseq
    %v349 = vshrl.u32 %v348, 7
    %v350 = vsub.s32 0, %v349
    %v351 = vrot.slane %v40, %v350
    %v369 = vunpack.c.l.b16 %v24
    %v370 = vunpack.c.l.b16 %v25
    %v371 = vunpack.c.l.b16 %v26
    %v372 = vunpack.c.l.b16 %v27
    %v373 = vunpack.c.l.b16 %v28
    %v374 = vunpack.c.l.b16 %v29
    %v375 = vunpack.c.l.b16 %v30
    %v376 = vunpack.c.l.b16 %v31
    %v377 = vunpack.c.l.b16 %v32
    %v378 = vunpack.c.l.b16 %v33
    %v379 = vunpack.c.l.b16 %v34
    %v380 = vunpack.c.l.b16 %v35
    %v381 = vunpack.c.l.b16 %v36
    %v382 = vunpack.c.l.b16 %v37
    %v383 = vunpack.c.l.b16 %v38
    %v384 = vunpack.c.l.b16 %v39
    %v385 = vpack.c.b16 %v370, %v369
    %v386 = vpack.c.b16 %v372, %v371
    %v387 = vpack.c.b16 %v374, %v373
    %v388 = vpack.c.b16 %v376, %v375
    %v389 = vpack.c.b16 %v378, %v377
    %v390 = vpack.c.b16 %v380, %v379
    %v391 = vpack.c.b16 %v382, %v381
    %v392 = vpack.c.b16 %v384, %v383
    %401 = vmatprep.subr.bf16.mxu0 0
    %402 = vmatpush1.bf16.msra.mxu0 %v385
    %403 = vmatprep.subr.bf16.mxu0 0
    %404 = vmatpush1.bf16.msra.mxu0 %v386
    %405 = vmatprep.subr.bf16.mxu0 0
    %406 = vmatpush1.bf16.msra.mxu0 %v387
    %407 = vmatprep.subr.bf16.mxu0 0
    %408 = vmatpush1.bf16.msra.mxu0 %v388
    %409 = vmatprep.subr.bf16.mxu0 0
    %410 = vmatpush1.bf16.msra.mxu0 %v389
    %411 = vmatprep.subr.bf16.mxu0 0
    %412 = vmatpush1.bf16.msra.mxu0 %v390
    %413 = vmatprep.subr.bf16.mxu0 0
    %414 = vmatpush1.bf16.msra.mxu0 %v391
    %415 = vmatprep.subr.bf16.mxu0 0
    %416 = vmatpush1.bf16.msra.mxu0 %v392
    %417 = vmatprep.subr.bf16.mxu0 0
    %418 = vmatpush1.bf16.msra.mxu0 0
    %419 = vmatprep.subr.bf16.mxu0 0
    %420 = vmatpush1.bf16.msra.mxu0 0
    %421 = vmatprep.subr.bf16.mxu0 0
    %422 = vmatpush1.bf16.msra.mxu0 0
    %423 = vmatprep.subr.bf16.mxu0 0
    %424 = vmatpush1.bf16.msra.mxu0 0
    %425 = vmatprep.subr.bf16.mxu0 0
    %426 = vmatpush1.bf16.msra.mxu0 0
    %427 = vmatprep.subr.bf16.mxu0 0
    %428 = vmatpush1.bf16.msra.mxu0 0
    %429 = vmatprep.subr.bf16.mxu0 0
    %430 = vmatpush1.bf16.msra.mxu0 0
    %431 = vmatprep.subr.bf16.mxu0 0
    %432 = vmatpush1.bf16.msra.mxu0 0
    %433 = vmatprep.mubr.bf16.mxu0 0
    %434 = vmatmul.mubr.bf16.gmra.mrb[0].mxu0 %v331
    %v435 = vpop.f32.mrb[0].mxu0
    %v436 = vadd.f32 %v351, %v435
    %v437 = vpop.f32.mrb[0].mxu0
    %v438 = vpop.f32.mrb[0].mxu0
    %v439 = vadd.f32 %v351, %v438
    %v440 = vpop.f32.mrb[0].mxu0
    %441 = vmatprep.mubr.bf16.mxu0 0
    %442 = vmatmul.mubr.bf16.gmra.mrb[0].mxu0 %v332
    %v443 = vpop.f32.mrb[0].mxu0
    %v444 = vadd.f32 %v351, %v443
    %v445 = vpop.f32.mrb[0].mxu0
    %v446 = vpop.f32.mrb[0].mxu0
    %v447 = vadd.f32 %v351, %v446
    %v448 = vpop.f32.mrb[0].mxu0
    %449 = vmatprep.mubr.bf16.mxu0 0
    %450 = vmatmul.mubr.bf16.gmra.mrb[0].mxu0 %v333
    %v451 = vpop.f32.mrb[0].mxu0
    %v452 = vadd.f32 %v351, %v451
    %v453 = vpop.f32.mrb[0].mxu0
    %v454 = vpop.f32.mrb[0].mxu0
    %v455 = vadd.f32 %v351, %v454
    %v456 = vpop.f32.mrb[0].mxu0
    %457 = vmatprep.mubr.bf16.mxu0 0
    %458 = vmatmul.mubr.bf16.gmra.mrb[0].mxu0 %v334
    %v459 = vpop.f32.mrb[0].mxu0
    %v460 = vadd.f32 %v351, %v459
    %v461 = vpop.f32.mrb[0].mxu0
    %v462 = vpop.f32.mrb[0].mxu0
    %v463 = vadd.f32 %v351, %v462
    %v464 = vpop.f32.mrb[0].mxu0
    %465 = vmatprep.mubr.bf16.mxu0 0
    %466 = vmatmul.mubr.bf16.gmra.mrb[0].mxu0 %v335
    %v467 = vpop.f32.mrb[0].mxu0
    %v468 = vadd.f32 %v351, %v467
    %v469 = vpop.f32.mrb[0].mxu0
    %v470 = vpop.f32.mrb[0].mxu0
    %v471 = vadd.f32 %v351, %v470
    %v472 = vpop.f32.mrb[0].mxu0
    %473 = vmatprep.mubr.bf16.mxu0 0
    %474 = vmatmul.mubr.bf16.gmra.mrb[0].mxu0 %v336
    %v475 = vpop.f32.mrb[0].mxu0
    %v476 = vadd.f32 %v351, %v475
    %v477 = vpop.f32.mrb[0].mxu0
    %v478 = vpop.f32.mrb[0].mxu0
    %v479 = vadd.f32 %v351, %v478
    %v480 = vpop.f32.mrb[0].mxu0
    %481 = vmatprep.mubr.bf16.mxu0 0
    %482 = vmatmul.mubr.bf16.gmra.mrb[0].mxu0 %v337
    %v483 = vpop.f32.mrb[0].mxu0
    %v484 = vadd.f32 %v351, %v483
    %v485 = vpop.f32.mrb[0].mxu0
    %v486 = vpop.f32.mrb[0].mxu0
    %v487 = vadd.f32 %v351, %v486
    %v488 = vpop.f32.mrb[0].mxu0
    %489 = vmatprep.mubr.bf16.mxu0 0
    %490 = vmatmul.mubr.bf16.gmra.mrb[0].mxu0 %v338
    %v491 = vpop.f32.mrb[0].mxu0
    %v492 = vadd.f32 %v351, %v491
    %v493 = vpop.f32.mrb[0].mxu0
    %v494 = vpop.f32.mrb[0].mxu0
    %v495 = vadd.f32 %v351, %v494
    %v496 = vpop.f32.mrb[0].mxu0
    %497 = vmatprep.mubr.bf16.mxu0 0
    %498 = vmatmul.mubr.bf16.gmra.mrb[0].mxu0 %v339
    %v499 = vpop.f32.mrb[0].mxu0
    %v500 = vadd.f32 %v351, %v499
    %v501 = vpop.f32.mrb[0].mxu0
    %v502 = vpop.f32.mrb[0].mxu0
    %v503 = vadd.f32 %v351, %v502
    %v504 = vpop.f32.mrb[0].mxu0
    %505 = vmatprep.mubr.bf16.mxu0 0
    %506 = vmatmul.mubr.bf16.gmra.mrb[0].mxu0 %v340
    %v507 = vpop.f32.mrb[0].mxu0
    %v508 = vadd.f32 %v351, %v507
    %v509 = vpop.f32.mrb[0].mxu0
    %v510 = vpop.f32.mrb[0].mxu0
    %v511 = vadd.f32 %v351, %v510
    %v512 = vpop.f32.mrb[0].mxu0
    %513 = vmatprep.mubr.bf16.mxu0 0
    %514 = vmatmul.mubr.bf16.gmra.mrb[0].mxu0 %v341
    %v515 = vpop.f32.mrb[0].mxu0
    %v516 = vadd.f32 %v351, %v515
    %v517 = vpop.f32.mrb[0].mxu0
    %v518 = vpop.f32.mrb[0].mxu0
    %v519 = vadd.f32 %v351, %v518
    %v520 = vpop.f32.mrb[0].mxu0
    %521 = vmatprep.mubr.bf16.mxu0 0
    %522 = vmatmul.mubr.bf16.gmra.mrb[0].mxu0 %v342
    %v523 = vpop.f32.mrb[0].mxu0
    %v524 = vadd.f32 %v351, %v523
    %v525 = vpop.f32.mrb[0].mxu0
    %v526 = vpop.f32.mrb[0].mxu0
    %v527 = vadd.f32 %v351, %v526
    %v528 = vpop.f32.mrb[0].mxu0
    %529 = vmatprep.mubr.bf16.mxu0 0
    %530 = vmatmul.mubr.bf16.gmra.mrb[0].mxu0 %v343
    %v531 = vpop.f32.mrb[0].mxu0
    %v532 = vadd.f32 %v351, %v531
    %v533 = vpop.f32.mrb[0].mxu0
    %v534 = vpop.f32.mrb[0].mxu0
    %v535 = vadd.f32 %v351, %v534
    %v536 = vpop.f32.mrb[0].mxu0
    %537 = vmatprep.mubr.bf16.mxu0 0
    %538 = vmatmul.mubr.bf16.gmra.mrb[0].mxu0 %v344
    %v539 = vpop.f32.mrb[0].mxu0
    %v540 = vadd.f32 %v351, %v539
    %v541 = vpop.f32.mrb[0].mxu0
    %v542 = vpop.f32.mrb[0].mxu0
    %v543 = vadd.f32 %v351, %v542
    %v544 = vpop.f32.mrb[0].mxu0
    %545 = vmatprep.mubr.bf16.mxu0 0
    %546 = vmatmul.mubr.bf16.gmra.mrb[0].mxu0 %v345
    %v547 = vpop.f32.mrb[0].mxu0
    %v548 = vadd.f32 %v351, %v547
    %v549 = vpop.f32.mrb[0].mxu0
    %v550 = vpop.f32.mrb[0].mxu0
    %v551 = vadd.f32 %v351, %v550
    %v552 = vpop.f32.mrb[0].mxu0
    %553 = vmatprep.mubr.bf16.mxu0 0
    %554 = vmatmul.mubr.bf16.gmra.mrb[0].mxu0 %v346
    %v555 = vpop.f32.mrb[0].mxu0
    %v556 = vadd.f32 %v351, %v555
    %v557 = vpop.f32.mrb[0].mxu0
    %v558 = vpop.f32.mrb[0].mxu0
    %v559 = vadd.f32 %v351, %v558
    %v560 = vpop.f32.mrb[0].mxu0
    %561 = vdwg.mxu0
    %562 = vmax.xlane.f32.xlu0 %v436
    %v563 = vpop.xlane.xlu0 %562
    %564 = vmax.xlane.f32.xlu0 %v439
    %v565 = vpop.xlane.xlu0 %564
    %566 = vmax.xlane.f32.xlu0 %v444
    %v567 = vpop.xlane.xlu0 %566
    %568 = vmax.xlane.f32.xlu0 %v447
    %v569 = vpop.xlane.xlu0 %568
    %570 = vmax.xlane.f32.xlu0 %v452
    %v571 = vpop.xlane.xlu0 %570
    %572 = vmax.xlane.f32.xlu0 %v455
    %v573 = vpop.xlane.xlu0 %572
    %574 = vmax.xlane.f32.xlu0 %v460
    %v575 = vpop.xlane.xlu0 %574
    %576 = vmax.xlane.f32.xlu0 %v463
    %v577 = vpop.xlane.xlu0 %576
    %578 = vmax.xlane.f32.xlu0 %v468
    %v579 = vpop.xlane.xlu0 %578
    %580 = vmax.xlane.f32.xlu0 %v471
    %v581 = vpop.xlane.xlu0 %580
    %582 = vmax.xlane.f32.xlu0 %v476
    %v583 = vpop.xlane.xlu0 %582
    %584 = vmax.xlane.f32.xlu0 %v479
    %v585 = vpop.xlane.xlu0 %584
    %586 = vmax.xlane.f32.xlu0 %v484
    %v587 = vpop.xlane.xlu0 %586
    %588 = vmax.xlane.f32.xlu0 %v487
    %v589 = vpop.xlane.xlu0 %588
    %590 = vmax.xlane.f32.xlu0 %v492
    %v591 = vpop.xlane.xlu0 %590
    %592 = vmax.xlane.f32.xlu0 %v495
    %v593 = vpop.xlane.xlu0 %592
    %594 = vmax.xlane.f32.xlu0 %v500
    %v595 = vpop.xlane.xlu0 %594
    %596 = vmax.xlane.f32.xlu0 %v503
    %v597 = vpop.xlane.xlu0 %596
    %598 = vmax.xlane.f32.xlu0 %v508
    %v599 = vpop.xlane.xlu0 %598
    %600 = vmax.xlane.f32.xlu0 %v511
    %v601 = vpop.xlane.xlu0 %600
    %602 = vmax.xlane.f32.xlu0 %v516
    %v603 = vpop.xlane.xlu0 %602
    %604 = vmax.xlane.f32.xlu0 %v519
    %v605 = vpop.xlane.xlu0 %604
    %606 = vmax.xlane.f32.xlu0 %v524
    %v607 = vpop.xlane.xlu0 %606
    %608 = vmax.xlane.f32.xlu0 %v527
    %v609 = vpop.xlane.xlu0 %608
    %610 = vmax.xlane.f32.xlu0 %v532
    %v611 = vpop.xlane.xlu0 %610
    %612 = vmax.xlane.f32.xlu0 %v535
    %v613 = vpop.xlane.xlu0 %612
    %614 = vmax.xlane.f32.xlu0 %v540
    %v615 = vpop.xlane.xlu0 %614
    %616 = vmax.xlane.f32.xlu0 %v543
    %v617 = vpop.xlane.xlu0 %616
    %618 = vmax.xlane.f32.xlu0 %v548
    %v619 = vpop.xlane.xlu0 %618
    %620 = vmax.xlane.f32.xlu0 %v551
    %v621 = vpop.xlane.xlu0 %620
    %622 = vmax.xlane.f32.xlu0 %v556
    %v623 = vpop.xlane.xlu0 %622
    %624 = vmax.xlane.f32.xlu0 %v559
    %v625 = vpop.xlane.xlu0 %624
    %v626 = vsub.f32 %v436, %v563
    %v627 = vsub.f32 %v439, %v565
    %v628 = vsub.f32 %v444, %v567
    %v629 = vsub.f32 %v447, %v569
    %v630 = vsub.f32 %v452, %v571
    %v631 = vsub.f32 %v455, %v573
    %v632 = vsub.f32 %v460, %v575
    %v633 = vsub.f32 %v463, %v577
    %v634 = vsub.f32 %v468, %v579
    %v635 = vsub.f32 %v471, %v581
    %v636 = vsub.f32 %v476, %v583
    %v637 = vsub.f32 %v479, %v585
    %v638 = vsub.f32 %v484, %v587
    %v639 = vsub.f32 %v487, %v589
    %v640 = vsub.f32 %v492, %v591
    %v641 = vsub.f32 %v495, %v593
    %v642 = vsub.f32 %v500, %v595
    %v643 = vsub.f32 %v503, %v597
    %v644 = vsub.f32 %v508, %v599
    %v645 = vsub.f32 %v511, %v601
    %v646 = vsub.f32 %v516, %v603
    %v647 = vsub.f32 %v519, %v605
    %v648 = vsub.f32 %v524, %v607
    %v649 = vsub.f32 %v527, %v609
    %v650 = vsub.f32 %v532, %v611
    %v651 = vsub.f32 %v535, %v613
    %v652 = vsub.f32 %v540, %v615
    %v653 = vsub.f32 %v543, %v617
    %v654 = vsub.f32 %v548, %v619
    %v655 = vsub.f32 %v551, %v621
    %v656 = vsub.f32 %v556, %v623
    %v657 = vsub.f32 %v559, %v625
    %v658 = vmul.f32 %v626, 1.442695
    %v659 = vpow.pop %v658
    %v660 = vmul.f32 %v627, 1.442695
    %v661 = vpow.pop %v660
    %v662 = vmul.f32 %v628, 1.442695
    %v663 = vpow.pop %v662
    %v664 = vmul.f32 %v629, 1.442695
    %v665 = vpow.pop %v664
    %v666 = vmul.f32 %v630, 1.442695
    %v667 = vpow.pop %v666
    %v668 = vmul.f32 %v631, 1.442695
    %v669 = vpow.pop %v668
    %v670 = vmul.f32 %v632, 1.442695
    %v671 = vpow.pop %v670
    %v672 = vmul.f32 %v633, 1.442695
    %v673 = vpow.pop %v672
    %v674 = vmul.f32 %v634, 1.442695
    %v675 = vpow.pop %v674
    %v676 = vmul.f32 %v635, 1.442695
    %v677 = vpow.pop %v676
    %v678 = vmul.f32 %v636, 1.442695
    %v679 = vpow.pop %v678
    %v680 = vmul.f32 %v637, 1.442695
    %v681 = vpow.pop %v680
    %v682 = vmul.f32 %v638, 1.442695
    %v683 = vpow.pop %v682
    %v684 = vmul.f32 %v639, 1.442695
    %v685 = vpow.pop %v684
    %v686 = vmul.f32 %v640, 1.442695
    %v687 = vpow.pop %v686
    %v688 = vmul.f32 %v641, 1.442695
    %v689 = vpow.pop %v688
    %v690 = vmul.f32 %v642, 1.442695
    %v691 = vpow.pop %v690
    %v692 = vmul.f32 %v643, 1.442695
    %v693 = vpow.pop %v692
    %v694 = vmul.f32 %v644, 1.442695
    %v695 = vpow.pop %v694
    %v696 = vmul.f32 %v645, 1.442695
    %v697 = vpow.pop %v696
    %v698 = vmul.f32 %v646, 1.442695
    %v699 = vpow.pop %v698
    %v700 = vmul.f32 %v647, 1.442695
    %v701 = vpow.pop %v700
    %v702 = vmul.f32 %v648, 1.442695
    %v703 = vpow.pop %v702
    %v704 = vmul.f32 %v649, 1.442695
    %v705 = vpow.pop %v704
    %v706 = vmul.f32 %v650, 1.442695
    %v707 = vpow.pop %v706
    %v708 = vmul.f32 %v651, 1.442695
    %v709 = vpow.pop %v708
    %v710 = vmul.f32 %v652, 1.442695
    %v711 = vpow.pop %v710
    %v712 = vmul.f32 %v653, 1.442695
    %v713 = vpow.pop %v712
    %v714 = vmul.f32 %v654, 1.442695
    %v715 = vpow.pop %v714
    %v716 = vmul.f32 %v655, 1.442695
    %v717 = vpow.pop %v716
    %v718 = vmul.f32 %v656, 1.442695
    %v719 = vpow.pop %v718
    %v720 = vmul.f32 %v657, 1.442695
    %v721 = vpow.pop %v720
    %722 = vadd.xlane.f32.xlu0 %v659
    %v723 = vpop.xlane.xlu0 %722
    %724 = vadd.xlane.f32.xlu0 %v661
    %v725 = vpop.xlane.xlu0 %724
    %726 = vadd.xlane.f32.xlu0 %v663
    %v727 = vpop.xlane.xlu0 %726
    %728 = vadd.xlane.f32.xlu0 %v665
    %v729 = vpop.xlane.xlu0 %728
    %730 = vadd.xlane.f32.xlu0 %v667
    %v731 = vpop.xlane.xlu0 %730
    %732 = vadd.xlane.f32.xlu0 %v669
    %v733 = vpop.xlane.xlu0 %732
    %734 = vadd.xlane.f32.xlu0 %v671
    %v735 = vpop.xlane.xlu0 %734
    %736 = vadd.xlane.f32.xlu0 %v673
    %v737 = vpop.xlane.xlu0 %736
    %738 = vadd.xlane.f32.xlu0 %v675
    %v739 = vpop.xlane.xlu0 %738
    %740 = vadd.xlane.f32.xlu0 %v677
    %v741 = vpop.xlane.xlu0 %740
    %742 = vadd.xlane.f32.xlu0 %v679
    %v743 = vpop.xlane.xlu0 %742
    %744 = vadd.xlane.f32.xlu0 %v681
    %v745 = vpop.xlane.xlu0 %744
    %746 = vadd.xlane.f32.xlu0 %v683
    %v747 = vpop.xlane.xlu0 %746
    %748 = vadd.xlane.f32.xlu0 %v685
    %v749 = vpop.xlane.xlu0 %748
    %750 = vadd.xlane.f32.xlu0 %v687
    %v751 = vpop.xlane.xlu0 %750
    %752 = vadd.xlane.f32.xlu0 %v689
    %v753 = vpop.xlane.xlu0 %752
    %754 = vadd.xlane.f32.xlu0 %v691
    %v755 = vpop.xlane.xlu0 %754
    %756 = vadd.xlane.f32.xlu0 %v693
    %v757 = vpop.xlane.xlu0 %756
    %758 = vadd.xlane.f32.xlu0 %v695
    %v759 = vpop.xlane.xlu0 %758
    %760 = vadd.xlane.f32.xlu0 %v697
    %v761 = vpop.xlane.xlu0 %760
    %762 = vadd.xlane.f32.xlu0 %v699
    %v763 = vpop.xlane.xlu0 %762
    %764 = vadd.xlane.f32.xlu0 %v701
    %v765 = vpop.xlane.xlu0 %764
    %766 = vadd.xlane.f32.xlu0 %v703
    %v767 = vpop.xlane.xlu0 %766
    %768 = vadd.xlane.f32.xlu0 %v705
    %v769 = vpop.xlane.xlu0 %768
    %770 = vadd.xlane.f32.xlu0 %v707
    %v771 = vpop.xlane.xlu0 %770
    %772 = vadd.xlane.f32.xlu0 %v709
    %v773 = vpop.xlane.xlu0 %772
    %774 = vadd.xlane.f32.xlu0 %v711
    %v775 = vpop.xlane.xlu0 %774
    %776 = vadd.xlane.f32.xlu0 %v713
    %v777 = vpop.xlane.xlu0 %776
    %778 = vadd.xlane.f32.xlu0 %v715
    %v779 = vpop.xlane.xlu0 %778
    %780 = vadd.xlane.f32.xlu0 %v717
    %v781 = vpop.xlane.xlu0 %780
    %782 = vadd.xlane.f32.xlu0 %v719
    %v783 = vpop.xlane.xlu0 %782
    %784 = vadd.xlane.f32.xlu0 %v721
    %v785 = vpop.xlane.xlu0 %784
    %v786 = vrcp.pop %v723
    %v787 = vrcp.pop %v725
    %v788 = vrcp.pop %v727
    %v789 = vrcp.pop %v729
    %v790 = vrcp.pop %v731
    %v791 = vrcp.pop %v733
    %v792 = vrcp.pop %v735
    %v793 = vrcp.pop %v737
    %v794 = vrcp.pop %v739
    %v795 = vrcp.pop %v741
    %v796 = vrcp.pop %v743
    %v797 = vrcp.pop %v745
    %v798 = vrcp.pop %v747
    %v799 = vrcp.pop %v749
    %v800 = vrcp.pop %v751
    %v801 = vrcp.pop %v753
    %v802 = vrcp.pop %v755
    %v803 = vrcp.pop %v757
    %v804 = vrcp.pop %v759
    %v805 = vrcp.pop %v761
    %v806 = vrcp.pop %v763
    %v807 = vrcp.pop %v765
    %v808 = vrcp.pop %v767
    %v809 = vrcp.pop %v769
    %v810 = vrcp.pop %v771
    %v811 = vrcp.pop %v773
    %v812 = vrcp.pop %v775
    %v813 = vrcp.pop %v777
    %v814 = vrcp.pop %v779
    %v815 = vrcp.pop %v781
    %v816 = vrcp.pop %v783
    %v817 = vrcp.pop %v785
    %v818 = vmul.f32 %v659, %v786
    %v819 = vmul.f32 %v661, %v787
    %v820 = vmul.f32 %v663, %v788
    %v821 = vmul.f32 %v665, %v789
    %v822 = vmul.f32 %v667, %v790
    %v823 = vmul.f32 %v669, %v791
    %v824 = vmul.f32 %v671, %v792
    %v825 = vmul.f32 %v673, %v793
    %v826 = vmul.f32 %v675, %v794
    %v827 = vmul.f32 %v677, %v795
    %v828 = vmul.f32 %v679, %v796
    %v829 = vmul.f32 %v681, %v797
    %v830 = vmul.f32 %v683, %v798
    %v831 = vmul.f32 %v685, %v799
    %v832 = vmul.f32 %v687, %v800
    %v833 = vmul.f32 %v689, %v801
    %v834 = vmul.f32 %v691, %v802
    %v835 = vmul.f32 %v693, %v803
    %v836 = vmul.f32 %v695, %v804
    %v837 = vmul.f32 %v697, %v805
    %v838 = vmul.f32 %v699, %v806
    %v839 = vmul.f32 %v701, %v807
    %v840 = vmul.f32 %v703, %v808
    %v841 = vmul.f32 %v705, %v809
    %v842 = vmul.f32 %v707, %v810
    %v843 = vmul.f32 %v709, %v811
    %v844 = vmul.f32 %v711, %v812
    %v845 = vmul.f32 %v713, %v813
    %v846 = vmul.f32 %v715, %v814
    %v847 = vmul.f32 %v717, %v815
    %v848 = vmul.f32 %v719, %v816
    %v849 = vmul.f32 %v721, %v817
    %v850 = vmax.f32 %v818, %v822
    %v851 = vmax.f32 %v819, %v823
    %v852 = vmax.f32 %v820, %v824
    %v853 = vmax.f32 %v821, %v825
    %v854 = vmax.f32 %v850, %v826
    %v855 = vmax.f32 %v851, %v827
    %v856 = vmax.f32 %v852, %v828
    %v857 = vmax.f32 %v853, %v829
    %v858 = vmax.f32 %v854, %v830
    %v859 = vmax.f32 %v855, %v831
    %v860 = vmax.f32 %v856, %v832
    %v861 = vmax.f32 %v857, %v833
    %v862 = vmax.f32 %v858, %v834
    %v863 = vmax.f32 %v859, %v835
    %v864 = vmax.f32 %v860, %v836
    %v865 = vmax.f32 %v861, %v837
    %v866 = vmax.f32 %v862, %v838
    %v867 = vmax.f32 %v863, %v839
    %v868 = vmax.f32 %v864, %v840
    %v869 = vmax.f32 %v865, %v841
    %v870 = vmax.f32 %v866, %v842
    %v871 = vmax.f32 %v867, %v843
    %v872 = vmax.f32 %v868, %v844
    %v873 = vmax.f32 %v869, %v845
    %v874 = vmax.f32 %v870, %v846
    %v875 = vmax.f32 %v871, %v847
    %v876 = vmax.f32 %v872, %v848
    %v877 = vmax.f32 %v873, %v849
    %v878 = vmax.f32 %v874, %v875
    %v879 = vmax.f32 %v876, %v877
    %v880 = vmax.f32 %v878, %v879
    %v881 = vrot.slane %v880, 4
    %v882 = vmax.f32 %v880, %v881
    %v883 = vrot.slane %v882, 2
    %v884 = vmax.f32 %v882, %v883
    %v885 = vrot.slane %v884, 1
    %v886 = vmax.f32 %v884, %v885
    %887 = vst [vmem:[#allocation2] sm:$0x1] %v886
    %s888 = scalar_lea.vmem %s0, 8
    %v889 = vld [vmem:[%s888] sm:$0xff]
    %v891 = vcombine.high %v889, %v889
    %v893 = vpack.c.bf16 %v889, %v889
    %v894 = vpack.c.bf16 %v891, %v891
    %895 = vxpose.xlu0.c.b16.start [1/8] %v893, 128
    %896 = vxpose.xlu0.c.b16.cont [2/8] 0, 128
    %897 = vxpose.xlu0.c.b16.cont [3/8] 0, 128
    %898 = vxpose.xlu0.c.b16.cont [4/8] 0, 128
    %899 = vxpose.xlu0.c.b16.cont [5/8] 0, 128
    %900 = vxpose.xlu0.c.b16.cont [6/8] 0, 128
    %901 = vxpose.xlu0.c.b16.cont [7/8] 0, 128
    %902 = vxpose.xlu0.c.b16.end [8/8] 0, 128
    %v903 = vpop.trf.xlu0
    %v904 = vpop.trf.xlu0
    %v905 = vpop.trf.xlu0
    %v906 = vpop.trf.xlu0
    %v907 = vpop.trf.xlu0
    %v908 = vpop.trf.xlu0
    %v909 = vpop.trf.xlu0
    %v910 = vpop.trf.xlu0
    %911 = vxpose.xlu0.c.b16.start [1/8] %v894, 128
    %912 = vxpose.xlu0.c.b16.cont [2/8] 0, 128
    %913 = vxpose.xlu0.c.b16.cont [3/8] 0, 128
    %914 = vxpose.xlu0.c.b16.cont [4/8] 0, 128
    %915 = vxpose.xlu0.c.b16.cont [5/8] 0, 128
    %916 = vxpose.xlu0.c.b16.cont [6/8] 0, 128
    %917 = vxpose.xlu0.c.b16.cont [7/8] 0, 128
    %918 = vxpose.xlu0.c.b16.end [8/8] 0, 128
    %v919 = vpop.trf.xlu0
    %v920 = vpop.trf.xlu0
    %v921 = vpop.trf.xlu0
    %v922 = vpop.trf.xlu0
    %v923 = vpop.trf.xlu0
    %v924 = vpop.trf.xlu0
    %v925 = vpop.trf.xlu0
    %v926 = vpop.trf.xlu0
    %v928 = vsel %vm85, %v903, 0
    %v931 = vsel %vm85, %v904, 0
    %v934 = vsel %vm85, %v905, 0
    %v937 = vsel %vm85, %v906, 0
    %v940 = vsel %vm85, %v907, 0
    %v943 = vsel %vm85, %v908, 0
    %v946 = vsel %vm85, %v909, 0
    %v949 = vsel %vm85, %v910, 0
    %v952 = vsel %vm85, %v919, 0
    %v955 = vsel %vm85, %v920, 0
    %v958 = vsel %vm85, %v921, 0
    %v961 = vsel %vm85, %v922, 0
    %v964 = vsel %vm85, %v923, 0
    %v967 = vsel %vm85, %v924, 0
    %v970 = vsel %vm85, %v925, 0
    %v973 = vsel %vm85, %v926, 0
    %975 = vmatprep.subr.bf16.mxu0 0
    %976 = vmatpush1.bf16.msra.mxu0 %v136
    %977 = vmatprep.subr.bf16.mxu0 0
    %978 = vmatpush1.bf16.msra.mxu0 0
    %979 = vmatprep.subr.bf16.mxu0 0
    %980 = vmatpush1.bf16.msra.mxu0 0
    %981 = vmatprep.subr.bf16.mxu0 0
    %982 = vmatpush1.bf16.msra.mxu0 0
    %983 = vmatprep.subr.bf16.mxu0 0
    %984 = vmatpush1.bf16.msra.mxu0 0
    %985 = vmatprep.subr.bf16.mxu0 0
    %986 = vmatpush1.bf16.msra.mxu0 0
    %987 = vmatprep.subr.bf16.mxu0 0
    %988 = vmatpush1.bf16.msra.mxu0 0
    %989 = vmatprep.subr.bf16.mxu0 0
    %990 = vmatpush1.bf16.msra.mxu0 0
    %991 = vmatprep.subr.bf16.mxu0 0
    %992 = vmatpush1.bf16.msra.mxu0 0
    %993 = vmatprep.subr.bf16.mxu0 0
    %994 = vmatpush1.bf16.msra.mxu0 0
    %995 = vmatprep.subr.bf16.mxu0 0
    %996 = vmatpush1.bf16.msra.mxu0 0
    %997 = vmatprep.subr.bf16.mxu0 0
    %998 = vmatpush1.bf16.msra.mxu0 0
    %999 = vmatprep.subr.bf16.mxu0 0
    %1000 = vmatpush1.bf16.msra.mxu0 0
    %1001 = vmatprep.subr.bf16.mxu0 0
    %1002 = vmatpush1.bf16.msra.mxu0 0
    %1003 = vmatprep.subr.bf16.mxu0 0
    %1004 = vmatpush1.bf16.msra.mxu0 0
    %1005 = vmatprep.subr.bf16.mxu0 0
    %1006 = vmatpush1.bf16.msra.mxu0 0
    %1007 = vmatprep.mubr.bf16.mxu0 0
    %1008 = vmatmul.mubr.bf16.gmra.mrb[0].mxu0 %v928
    %v1009 = vpop.f32.mrb[0].mxu0
    %v1010 = vadd.f32 %v51, %v1009
    %v1011 = vpop.f32.mrb[0].mxu0
    %v1012 = vpop.f32.mrb[0].mxu0
    %v1013 = vadd.f32 %v51, %v1012
    %v1014 = vpop.f32.mrb[0].mxu0
    %1015 = vmatprep.mubr.bf16.mxu0 0
    %1016 = vmatmul.mubr.bf16.gmra.mrb[0].mxu0 %v931
    %v1017 = vpop.f32.mrb[0].mxu0
    %v1018 = vadd.f32 %v51, %v1017
    %v1019 = vpop.f32.mrb[0].mxu0
    %v1020 = vpop.f32.mrb[0].mxu0
    %v1021 = vadd.f32 %v51, %v1020
    %v1022 = vpop.f32.mrb[0].mxu0
    %1023 = vmatprep.mubr.bf16.mxu0 0
    %1024 = vmatmul.mubr.bf16.gmra.mrb[0].mxu0 %v934
    %v1025 = vpop.f32.mrb[0].mxu0
    %v1026 = vadd.f32 %v51, %v1025
    %v1027 = vpop.f32.mrb[0].mxu0
    %v1028 = vpop.f32.mrb[0].mxu0
    %v1029 = vadd.f32 %v51, %v1028
    %v1030 = vpop.f32.mrb[0].mxu0
    %1031 = vmatprep.mubr.bf16.mxu0 0
    %1032 = vmatmul.mubr.bf16.gmra.mrb[0].mxu0 %v937
    %v1033 = vpop.f32.mrb[0].mxu0
    %v1034 = vadd.f32 %v51, %v1033
    %v1035 = vpop.f32.mrb[0].mxu0
    %v1036 = vpop.f32.mrb[0].mxu0
    %v1037 = vadd.f32 %v51, %v1036
    %v1038 = vpop.f32.mrb[0].mxu0
    %1039 = vmatprep.mubr.bf16.mxu0 0
    %1040 = vmatmul.mubr.bf16.gmra.mrb[0].mxu0 %v940
    %v1041 = vpop.f32.mrb[0].mxu0
    %v1042 = vadd.f32 %v51, %v1041
    %v1043 = vpop.f32.mrb[0].mxu0
    %v1044 = vpop.f32.mrb[0].mxu0
    %v1045 = vadd.f32 %v51, %v1044
    %v1046 = vpop.f32.mrb[0].mxu0
    %1047 = vmatprep.mubr.bf16.mxu0 0
    %1048 = vmatmul.mubr.bf16.gmra.mrb[0].mxu0 %v943
    %v1049 = vpop.f32.mrb[0].mxu0
    %v1050 = vadd.f32 %v51, %v1049
    %v1051 = vpop.f32.mrb[0].mxu0
    %v1052 = vpop.f32.mrb[0].mxu0
    %v1053 = vadd.f32 %v51, %v1052
    %v1054 = vpop.f32.mrb[0].mxu0
    %1055 = vmatprep.mubr.bf16.mxu0 0
    %1056 = vmatmul.mubr.bf16.gmra.mrb[0].mxu0 %v946
    %v1057 = vpop.f32.mrb[0].mxu0
    %v1058 = vadd.f32 %v51, %v1057
    %v1059 = vpop.f32.mrb[0].mxu0
    %v1060 = vpop.f32.mrb[0].mxu0
    %v1061 = vadd.f32 %v51, %v1060
    %v1062 = vpop.f32.mrb[0].mxu0
    %1063 = vmatprep.mubr.bf16.mxu0 0
    %1064 = vmatmul.mubr.bf16.gmra.mrb[0].mxu0 %v949
    %v1065 = vpop.f32.mrb[0].mxu0
    %v1066 = vadd.f32 %v51, %v1065
    %v1067 = vpop.f32.mrb[0].mxu0
    %v1068 = vpop.f32.mrb[0].mxu0
    %v1069 = vadd.f32 %v51, %v1068
    %v1070 = vpop.f32.mrb[0].mxu0
    %1071 = vmatprep.mubr.bf16.mxu0 0
    %1072 = vmatmul.mubr.bf16.gmra.mrb[0].mxu0 %v952
    %v1073 = vpop.f32.mrb[0].mxu0
    %v1074 = vadd.f32 %v51, %v1073
    %v1075 = vpop.f32.mrb[0].mxu0
    %v1076 = vpop.f32.mrb[0].mxu0
    %v1077 = vadd.f32 %v51, %v1076
    %v1078 = vpop.f32.mrb[0].mxu0
    %1079 = vmatprep.mubr.bf16.mxu0 0
    %1080 = vmatmul.mubr.bf16.gmra.mrb[0].mxu0 %v955
    %v1081 = vpop.f32.mrb[0].mxu0
    %v1082 = vadd.f32 %v51, %v1081
    %v1083 = vpop.f32.mrb[0].mxu0
    %v1084 = vpop.f32.mrb[0].mxu0
    %v1085 = vadd.f32 %v51, %v1084
    %v1086 = vpop.f32.mrb[0].mxu0
    %1087 = vmatprep.mubr.bf16.mxu0 0
    %1088 = vmatmul.mubr.bf16.gmra.mrb[0].mxu0 %v958
    %v1089 = vpop.f32.mrb[0].mxu0
    %v1090 = vadd.f32 %v51, %v1089
    %v1091 = vpop.f32.mrb[0].mxu0
    %v1092 = vpop.f32.mrb[0].mxu0
    %v1093 = vadd.f32 %v51, %v1092
    %v1094 = vpop.f32.mrb[0].mxu0
    %1095 = vmatprep.mubr.bf16.mxu0 0
    %1096 = vmatmul.mubr.bf16.gmra.mrb[0].mxu0 %v961
    %v1097 = vpop.f32.mrb[0].mxu0
    %v1098 = vadd.f32 %v51, %v1097
    %v1099 = vpop.f32.mrb[0].mxu0
    %v1100 = vpop.f32.mrb[0].mxu0
    %v1101 = vadd.f32 %v51, %v1100
    %v1102 = vpop.f32.mrb[0].mxu0
    %1103 = vmatprep.mubr.bf16.mxu0 0
    %1104 = vmatmul.mubr.bf16.gmra.mrb[0].mxu0 %v964
    %v1105 = vpop.f32.mrb[0].mxu0
    %v1106 = vadd.f32 %v51, %v1105
    %v1107 = vpop.f32.mrb[0].mxu0
    %v1108 = vpop.f32.mrb[0].mxu0
    %v1109 = vadd.f32 %v51, %v1108
    %v1110 = vpop.f32.mrb[0].mxu0
    %1111 = vmatprep.mubr.bf16.mxu0 0
    %1112 = vmatmul.mubr.bf16.gmra.mrb[0].mxu0 %v967
    %v1113 = vpop.f32.mrb[0].mxu0
    %v1114 = vadd.f32 %v51, %v1113
    %v1115 = vpop.f32.mrb[0].mxu0
    %v1116 = vpop.f32.mrb[0].mxu0
    %v1117 = vadd.f32 %v51, %v1116
    %v1118 = vpop.f32.mrb[0].mxu0
    %1119 = vmatprep.mubr.bf16.mxu0 0
    %1120 = vmatmul.mubr.bf16.gmra.mrb[0].mxu0 %v970
    %v1121 = vpop.f32.mrb[0].mxu0
    %v1122 = vadd.f32 %v51, %v1121
    %v1123 = vpop.f32.mrb[0].mxu0
    %v1124 = vpop.f32.mrb[0].mxu0
    %v1125 = vadd.f32 %v51, %v1124
    %v1126 = vpop.f32.mrb[0].mxu0
    %1127 = vmatprep.mubr.bf16.mxu0 0
    %1128 = vmatmul.mubr.bf16.gmra.mrb[0].mxu0 %v973
    %v1129 = vpop.f32.mrb[0].mxu0
    %v1130 = vadd.f32 %v51, %v1129
    %v1131 = vpop.f32.mrb[0].mxu0
    %v1132 = vpop.f32.mrb[0].mxu0
    %v1133 = vadd.f32 %v51, %v1132
    %v1134 = vpop.f32.mrb[0].mxu0
    %1135 = vdwg.mxu0
    %v1136 = vmax.f32 %v1010, 0.0
    %v1137 = vmax.f32 %v1013, 0.0
    %v1138 = vmax.f32 %v1018, 0.0
    %v1139 = vmax.f32 %v1021, 0.0
    %v1140 = vmax.f32 %v1026, 0.0
    %v1141 = vmax.f32 %v1029, 0.0
    %v1142 = vmax.f32 %v1034, 0.0
    %v1143 = vmax.f32 %v1037, 0.0
    %v1144 = vmax.f32 %v1042, 0.0
    %v1145 = vmax.f32 %v1045, 0.0
    %v1146 = vmax.f32 %v1050, 0.0
    %v1147 = vmax.f32 %v1053, 0.0
    %v1148 = vmax.f32 %v1058, 0.0
    %v1149 = vmax.f32 %v1061, 0.0
    %v1150 = vmax.f32 %v1066, 0.0
    %v1151 = vmax.f32 %v1069, 0.0
    %v1152 = vmax.f32 %v1074, 0.0
    %v1153 = vmax.f32 %v1077, 0.0
    %v1154 = vmax.f32 %v1082, 0.0
    %v1155 = vmax.f32 %v1085, 0.0
    %v1156 = vmax.f32 %v1090, 0.0
    %v1157 = vmax.f32 %v1093, 0.0
    %v1158 = vmax.f32 %v1098, 0.0
    %v1159 = vmax.f32 %v1101, 0.0
    %v1160 = vmax.f32 %v1106, 0.0
    %v1161 = vmax.f32 %v1109, 0.0
    %v1162 = vmax.f32 %v1114, 0.0
    %v1163 = vmax.f32 %v1117, 0.0
    %v1164 = vmax.f32 %v1122, 0.0
    %v1165 = vmax.f32 %v1125, 0.0
    %v1166 = vmax.f32 %v1130, 0.0
    %v1167 = vmax.f32 %v1133, 0.0
    %v1168 = vpack.c.bf16 %v1137, %v1136
    %v1169 = vpack.c.bf16 %v1139, %v1138
    %v1170 = vpack.c.bf16 %v1141, %v1140
    %v1171 = vpack.c.bf16 %v1143, %v1142
    %v1172 = vpack.c.bf16 %v1145, %v1144
    %v1173 = vpack.c.bf16 %v1147, %v1146
    %v1174 = vpack.c.bf16 %v1149, %v1148
    %v1175 = vpack.c.bf16 %v1151, %v1150
    %v1176 = vpack.c.bf16 %v1153, %v1152
    %v1177 = vpack.c.bf16 %v1155, %v1154
    %v1178 = vpack.c.bf16 %v1157, %v1156
    %v1179 = vpack.c.bf16 %v1159, %v1158
    %v1180 = vpack.c.bf16 %v1161, %v1160
    %v1181 = vpack.c.bf16 %v1163, %v1162
    %v1182 = vpack.c.bf16 %v1165, %v1164
    %v1183 = vpack.c.bf16 %v1167, %v1166
    %1184 = vmatprep.subr.bf16.mxu0 0
    %1185 = vmatpush1.bf16.msra.mxu0 %v385
    %1186 = vmatprep.subr.bf16.mxu0 0
    %1187 = vmatpush1.bf16.msra.mxu0 %v386
    %1188 = vmatprep.subr.bf16.mxu0 0
    %1189 = vmatpush1.bf16.msra.mxu0 %v387
    %1190 = vmatprep.subr.bf16.mxu0 0
    %1191 = vmatpush1.bf16.msra.mxu0 %v388
    %1192 = vmatprep.subr.bf16.mxu0 0
    %1193 = vmatpush1.bf16.msra.mxu0 %v389
    %1194 = vmatprep.subr.bf16.mxu0 0
    %1195 = vmatpush1.bf16.msra.mxu0 %v390
    %1196 = vmatprep.subr.bf16.mxu0 0
    %1197 = vmatpush1.bf16.msra.mxu0 %v391
    %1198 = vmatprep.subr.bf16.mxu0 0
    %1199 = vmatpush1.bf16.msra.mxu0 %v392
    %1200 = vmatprep.subr.bf16.mxu0 0
    %1201 = vmatpush1.bf16.msra.mxu0 0
    %1202 = vmatprep.subr.bf16.mxu0 0
    %1203 = vmatpush1.bf16.msra.mxu0 0
    %1204 = vmatprep.subr.bf16.mxu0 0
    %1205 = vmatpush1.bf16.msra.mxu0 0
    %1206 = vmatprep.subr.bf16.mxu0 0
    %1207 = vmatpush1.bf16.msra.mxu0 0
    %1208 = vmatprep.subr.bf16.mxu0 0
    %1209 = vmatpush1.bf16.msra.mxu0 0
    %1210 = vmatprep.subr.bf16.mxu0 0
    %1211 = vmatpush1.bf16.msra.mxu0 0
    %1212 = vmatprep.subr.bf16.mxu0 0
    %1213 = vmatpush1.bf16.msra.mxu0 0
    %1214 = vmatprep.subr.bf16.mxu0 0
    %1215 = vmatpush1.bf16.msra.mxu0 0
    %1216 = vmatprep.mubr.bf16.mxu0 0
    %1217 = vmatmul.mubr.bf16.gmra.mrb[0].mxu0 %v1168
    %v1218 = vpop.f32.mrb[0].mxu0
    %v1219 = vadd.f32 %v351, %v1218
    %v1220 = vpop.f32.mrb[0].mxu0
    %v1221 = vpop.f32.mrb[0].mxu0
    %v1222 = vadd.f32 %v351, %v1221
    %v1223 = vpop.f32.mrb[0].mxu0
    %1224 = vmatprep.mubr.bf16.mxu0 0
    %1225 = vmatmul.mubr.bf16.gmra.mrb[0].mxu0 %v1169
    %v1226 = vpop.f32.mrb[0].mxu0
    %v1227 = vadd.f32 %v351, %v1226
    %v1228 = vpop.f32.mrb[0].mxu0
    %v1229 = vpop.f32.mrb[0].mxu0
    %v1230 = vadd.f32 %v351, %v1229
    %v1231 = vpop.f32.mrb[0].mxu0
    %1232 = vmatprep.mubr.bf16.mxu0 0
    %1233 = vmatmul.mubr.bf16.gmra.mrb[0].mxu0 %v1170
    %v1234 = vpop.f32.mrb[0].mxu0
    %v1235 = vadd.f32 %v351, %v1234
    %v1236 = vpop.f32.mrb[0].mxu0
    %v1237 = vpop.f32.mrb[0].mxu0
    %v1238 = vadd.f32 %v351, %v1237
    %v1239 = vpop.f32.mrb[0].mxu0
    %1240 = vmatprep.mubr.bf16.mxu0 0
    %1241 = vmatmul.mubr.bf16.gmra.mrb[0].mxu0 %v1171
    %v1242 = vpop.f32.mrb[0].mxu0
    %v1243 = vadd.f32 %v351, %v1242
    %v1244 = vpop.f32.mrb[0].mxu0
    %v1245 = vpop.f32.mrb[0].mxu0
    %v1246 = vadd.f32 %v351, %v1245
    %v1247 = vpop.f32.mrb[0].mxu0
    %1248 = vmatprep.mubr.bf16.mxu0 0
    %1249 = vmatmul.mubr.bf16.gmra.mrb[0].mxu0 %v1172
    %v1250 = vpop.f32.mrb[0].mxu0
    %v1251 = vadd.f32 %v351, %v1250
    %v1252 = vpop.f32.mrb[0].mxu0
    %v1253 = vpop.f32.mrb[0].mxu0
    %v1254 = vadd.f32 %v351, %v1253
    %v1255 = vpop.f32.mrb[0].mxu0
    %1256 = vmatprep.mubr.bf16.mxu0 0
    %1257 = vmatmul.mubr.bf16.gmra.mrb[0].mxu0 %v1173
    %v1258 = vpop.f32.mrb[0].mxu0
    %v1259 = vadd.f32 %v351, %v1258
    %v1260 = vpop.f32.mrb[0].mxu0
    %v1261 = vpop.f32.mrb[0].mxu0
    %v1262 = vadd.f32 %v351, %v1261
    %v1263 = vpop.f32.mrb[0].mxu0
    %1264 = vmatprep.mubr.bf16.mxu0 0
    %1265 = vmatmul.mubr.bf16.gmra.mrb[0].mxu0 %v1174
    %v1266 = vpop.f32.mrb[0].mxu0
    %v1267 = vadd.f32 %v351, %v1266
    %v1268 = vpop.f32.mrb[0].mxu0
    %v1269 = vpop.f32.mrb[0].mxu0
    %v1270 = vadd.f32 %v351, %v1269
    %v1271 = vpop.f32.mrb[0].mxu0
    %1272 = vmatprep.mubr.bf16.mxu0 0
    %1273 = vmatmul.mubr.bf16.gmra.mrb[0].mxu0 %v1175
    %v1274 = vpop.f32.mrb[0].mxu0
    %v1275 = vadd.f32 %v351, %v1274
    %v1276 = vpop.f32.mrb[0].mxu0
    %v1277 = vpop.f32.mrb[0].mxu0
    %v1278 = vadd.f32 %v351, %v1277
    %v1279 = vpop.f32.mrb[0].mxu0
    %1280 = vmatprep.mubr.bf16.mxu0 0
    %1281 = vmatmul.mubr.bf16.gmra.mrb[0].mxu0 %v1176
    %v1282 = vpop.f32.mrb[0].mxu0
    %v1283 = vadd.f32 %v351, %v1282
    %v1284 = vpop.f32.mrb[0].mxu0
    %v1285 = vpop.f32.mrb[0].mxu0
    %v1286 = vadd.f32 %v351, %v1285
    %v1287 = vpop.f32.mrb[0].mxu0
    %1288 = vmatprep.mubr.bf16.mxu0 0
    %1289 = vmatmul.mubr.bf16.gmra.mrb[0].mxu0 %v1177
    %v1290 = vpop.f32.mrb[0].mxu0
    %v1291 = vadd.f32 %v351, %v1290
    %v1292 = vpop.f32.mrb[0].mxu0
    %v1293 = vpop.f32.mrb[0].mxu0
    %v1294 = vadd.f32 %v351, %v1293
    %v1295 = vpop.f32.mrb[0].mxu0
    %1296 = vmatprep.mubr.bf16.mxu0 0
    %1297 = vmatmul.mubr.bf16.gmra.mrb[0].mxu0 %v1178
    %v1298 = vpop.f32.mrb[0].mxu0
    %v1299 = vadd.f32 %v351, %v1298
    %v1300 = vpop.f32.mrb[0].mxu0
    %v1301 = vpop.f32.mrb[0].mxu0
    %v1302 = vadd.f32 %v351, %v1301
    %v1303 = vpop.f32.mrb[0].mxu0
    %1304 = vmatprep.mubr.bf16.mxu0 0
    %1305 = vmatmul.mubr.bf16.gmra.mrb[0].mxu0 %v1179
    %v1306 = vpop.f32.mrb[0].mxu0
    %v1307 = vadd.f32 %v351, %v1306
    %v1308 = vpop.f32.mrb[0].mxu0
    %v1309 = vpop.f32.mrb[0].mxu0
    %v1310 = vadd.f32 %v351, %v1309
    %v1311 = vpop.f32.mrb[0].mxu0
    %1312 = vmatprep.mubr.bf16.mxu0 0
    %1313 = vmatmul.mubr.bf16.gmra.mrb[0].mxu0 %v1180
    %v1314 = vpop.f32.mrb[0].mxu0
    %v1315 = vadd.f32 %v351, %v1314
    %v1316 = vpop.f32.mrb[0].mxu0
    %v1317 = vpop.f32.mrb[0].mxu0
    %v1318 = vadd.f32 %v351, %v1317
    %v1319 = vpop.f32.mrb[0].mxu0
    %1320 = vmatprep.mubr.bf16.mxu0 0
    %1321 = vmatmul.mubr.bf16.gmra.mrb[0].mxu0 %v1181
    %v1322 = vpop.f32.mrb[0].mxu0
    %v1323 = vadd.f32 %v351, %v1322
    %v1324 = vpop.f32.mrb[0].mxu0
    %v1325 = vpop.f32.mrb[0].mxu0
    %v1326 = vadd.f32 %v351, %v1325
    %v1327 = vpop.f32.mrb[0].mxu0
    %1328 = vmatprep.mubr.bf16.mxu0 0
    %1329 = vmatmul.mubr.bf16.gmra.mrb[0].mxu0 %v1182
    %v1330 = vpop.f32.mrb[0].mxu0
    %v1331 = vadd.f32 %v351, %v1330
    %v1332 = vpop.f32.mrb[0].mxu0
    %v1333 = vpop.f32.mrb[0].mxu0
    %v1334 = vadd.f32 %v351, %v1333
    %v1335 = vpop.f32.mrb[0].mxu0
    %1336 = vmatprep.mubr.bf16.mxu0 0
    %1337 = vmatmul.mubr.bf16.gmra.mrb[0].mxu0 %v1183
    %v1338 = vpop.f32.mrb[0].mxu0
    %v1339 = vadd.f32 %v351, %v1338
    %v1340 = vpop.f32.mrb[0].mxu0
    %v1341 = vpop.f32.mrb[0].mxu0
    %v1342 = vadd.f32 %v351, %v1341
    %v1343 = vpop.f32.mrb[0].mxu0
    %1344 = vdwg.mxu0
    %1345 = vmax.xlane.f32.xlu0 %v1219
    %v1346 = vpop.xlane.xlu0 %1345
    %1347 = vmax.xlane.f32.xlu0 %v1222
    %v1348 = vpop.xlane.xlu0 %1347
    %1349 = vmax.xlane.f32.xlu0 %v1227
    %v1350 = vpop.xlane.xlu0 %1349
    %1351 = vmax.xlane.f32.xlu0 %v1230
    %v1352 = vpop.xlane.xlu0 %1351
    %1353 = vmax.xlane.f32.xlu0 %v1235
    %v1354 = vpop.xlane.xlu0 %1353
    %1355 = vmax.xlane.f32.xlu0 %v1238
    %v1356 = vpop.xlane.xlu0 %1355
    %1357 = vmax.xlane.f32.xlu0 %v1243
    %v1358 = vpop.xlane.xlu0 %1357
    %1359 = vmax.xlane.f32.xlu0 %v1246
    %v1360 = vpop.xlane.xlu0 %1359
    %1361 = vmax.xlane.f32.xlu0 %v1251
    %v1362 = vpop.xlane.xlu0 %1361
    %1363 = vmax.xlane.f32.xlu0 %v1254
    %v1364 = vpop.xlane.xlu0 %1363
    %1365 = vmax.xlane.f32.xlu0 %v1259
    %v1366 = vpop.xlane.xlu0 %1365
    %1367 = vmax.xlane.f32.xlu0 %v1262
    %v1368 = vpop.xlane.xlu0 %1367
    %1369 = vmax.xlane.f32.xlu0 %v1267
    %v1370 = vpop.xlane.xlu0 %1369
    %1371 = vmax.xlane.f32.xlu0 %v1270
    %v1372 = vpop.xlane.xlu0 %1371
    %1373 = vmax.xlane.f32.xlu0 %v1275
    %v1374 = vpop.xlane.xlu0 %1373
    %1375 = vmax.xlane.f32.xlu0 %v1278
    %v1376 = vpop.xlane.xlu0 %1375
    %1377 = vmax.xlane.f32.xlu0 %v1283
    %v1378 = vpop.xlane.xlu0 %1377
    %1379 = vmax.xlane.f32.xlu0 %v1286
    %v1380 = vpop.xlane.xlu0 %1379
    %1381 = vmax.xlane.f32.xlu0 %v1291
    %v1382 = vpop.xlane.xlu0 %1381
    %1383 = vmax.xlane.f32.xlu0 %v1294
    %v1384 = vpop.xlane.xlu0 %1383
    %1385 = vmax.xlane.f32.xlu0 %v1299
    %v1386 = vpop.xlane.xlu0 %1385
    %1387 = vmax.xlane.f32.xlu0 %v1302
    %v1388 = vpop.xlane.xlu0 %1387
    %1389 = vmax.xlane.f32.xlu0 %v1307
    %v1390 = vpop.xlane.xlu0 %1389
    %1391 = vmax.xlane.f32.xlu0 %v1310
    %v1392 = vpop.xlane.xlu0 %1391
    %1393 = vmax.xlane.f32.xlu0 %v1315
    %v1394 = vpop.xlane.xlu0 %1393
    %1395 = vmax.xlane.f32.xlu0 %v1318
    %v1396 = vpop.xlane.xlu0 %1395
    %1397 = vmax.xlane.f32.xlu0 %v1323
    %v1398 = vpop.xlane.xlu0 %1397
    %1399 = vmax.xlane.f32.xlu0 %v1326
    %v1400 = vpop.xlane.xlu0 %1399
    %1401 = vmax.xlane.f32.xlu0 %v1331
    %v1402 = vpop.xlane.xlu0 %1401
    %1403 = vmax.xlane.f32.xlu0 %v1334
    %v1404 = vpop.xlane.xlu0 %1403
    %1405 = vmax.xlane.f32.xlu0 %v1339
    %v1406 = vpop.xlane.xlu0 %1405
    %1407 = vmax.xlane.f32.xlu0 %v1342
    %v1408 = vpop.xlane.xlu0 %1407
    %v1409 = vsub.f32 %v1219, %v1346
    %v1410 = vsub.f32 %v1222, %v1348
    %v1411 = vsub.f32 %v1227, %v1350
    %v1412 = vsub.f32 %v1230, %v1352
    %v1413 = vsub.f32 %v1235, %v1354
    %v1414 = vsub.f32 %v1238, %v1356
    %v1415 = vsub.f32 %v1243, %v1358
    %v1416 = vsub.f32 %v1246, %v1360
    %v1417 = vsub.f32 %v1251, %v1362
    %v1418 = vsub.f32 %v1254, %v1364
    %v1419 = vsub.f32 %v1259, %v1366
    %v1420 = vsub.f32 %v1262, %v1368
    %v1421 = vsub.f32 %v1267, %v1370
    %v1422 = vsub.f32 %v1270, %v1372
    %v1423 = vsub.f32 %v1275, %v1374
    %v1424 = vsub.f32 %v1278, %v1376
    %v1425 = vsub.f32 %v1283, %v1378
    %v1426 = vsub.f32 %v1286, %v1380
    %v1427 = vsub.f32 %v1291, %v1382
    %v1428 = vsub.f32 %v1294, %v1384
    %v1429 = vsub.f32 %v1299, %v1386
    %v1430 = vsub.f32 %v1302, %v1388
    %v1431 = vsub.f32 %v1307, %v1390
    %v1432 = vsub.f32 %v1310, %v1392
    %v1433 = vsub.f32 %v1315, %v1394
    %v1434 = vsub.f32 %v1318, %v1396
    %v1435 = vsub.f32 %v1323, %v1398
    %v1436 = vsub.f32 %v1326, %v1400
    %v1437 = vsub.f32 %v1331, %v1402
    %v1438 = vsub.f32 %v1334, %v1404
    %v1439 = vsub.f32 %v1339, %v1406
    %v1440 = vsub.f32 %v1342, %v1408
    %v1441 = vmul.f32 %v1409, 1.442695
    %v1442 = vpow.pop %v1441
    %v1443 = vmul.f32 %v1410, 1.442695
    %v1444 = vpow.pop %v1443
    %v1445 = vmul.f32 %v1411, 1.442695
    %v1446 = vpow.pop %v1445
    %v1447 = vmul.f32 %v1412, 1.442695
    %v1448 = vpow.pop %v1447
    %v1449 = vmul.f32 %v1413, 1.442695
    %v1450 = vpow.pop %v1449
    %v1451 = vmul.f32 %v1414, 1.442695
    %v1452 = vpow.pop %v1451
    %v1453 = vmul.f32 %v1415, 1.442695
    %v1454 = vpow.pop %v1453
    %v1455 = vmul.f32 %v1416, 1.442695
    %v1456 = vpow.pop %v1455
    %v1457 = vmul.f32 %v1417, 1.442695
    %v1458 = vpow.pop %v1457
    %v1459 = vmul.f32 %v1418, 1.442695
    %v1460 = vpow.pop %v1459
    %v1461 = vmul.f32 %v1419, 1.442695
    %v1462 = vpow.pop %v1461
    %v1463 = vmul.f32 %v1420, 1.442695
    %v1464 = vpow.pop %v1463
    %v1465 = vmul.f32 %v1421, 1.442695
    %v1466 = vpow.pop %v1465
    %v1467 = vmul.f32 %v1422, 1.442695
    %v1468 = vpow.pop %v1467
    %v1469 = vmul.f32 %v1423, 1.442695
    %v1470 = vpow.pop %v1469
    %v1471 = vmul.f32 %v1424, 1.442695
    %v1472 = vpow.pop %v1471
    %v1473 = vmul.f32 %v1425, 1.442695
    %v1474 = vpow.pop %v1473
    %v1475 = vmul.f32 %v1426, 1.442695
    %v1476 = vpow.pop %v1475
    %v1477 = vmul.f32 %v1427, 1.442695
    %v1478 = vpow.pop %v1477
    %v1479 = vmul.f32 %v1428, 1.442695
    %v1480 = vpow.pop %v1479
    %v1481 = vmul.f32 %v1429, 1.442695
    %v1482 = vpow.pop %v1481
    %v1483 = vmul.f32 %v1430, 1.442695
    %v1484 = vpow.pop %v1483
    %v1485 = vmul.f32 %v1431, 1.442695
    %v1486 = vpow.pop %v1485
    %v1487 = vmul.f32 %v1432, 1.442695
    %v1488 = vpow.pop %v1487
    %v1489 = vmul.f32 %v1433, 1.442695
    %v1490 = vpow.pop %v1489
    %v1491 = vmul.f32 %v1434, 1.442695
    %v1492 = vpow.pop %v1491
    %v1493 = vmul.f32 %v1435, 1.442695
    %v1494 = vpow.pop %v1493
    %v1495 = vmul.f32 %v1436, 1.442695
    %v1496 = vpow.pop %v1495
    %v1497 = vmul.f32 %v1437, 1.442695
    %v1498 = vpow.pop %v1497
    %v1499 = vmul.f32 %v1438, 1.442695
    %v1500 = vpow.pop %v1499
    %v1501 = vmul.f32 %v1439, 1.442695
    %v1502 = vpow.pop %v1501
    %v1503 = vmul.f32 %v1440, 1.442695
    %v1504 = vpow.pop %v1503
    %1505 = vadd.xlane.f32.xlu0 %v1442
    %v1506 = vpop.xlane.xlu0 %1505
    %1507 = vadd.xlane.f32.xlu0 %v1444
    %v1508 = vpop.xlane.xlu0 %1507
    %1509 = vadd.xlane.f32.xlu0 %v1446
    %v1510 = vpop.xlane.xlu0 %1509
    %1511 = vadd.xlane.f32.xlu0 %v1448
    %v1512 = vpop.xlane.xlu0 %1511
    %1513 = vadd.xlane.f32.xlu0 %v1450
    %v1514 = vpop.xlane.xlu0 %1513
    %1515 = vadd.xlane.f32.xlu0 %v1452
    %v1516 = vpop.xlane.xlu0 %1515
    %1517 = vadd.xlane.f32.xlu0 %v1454
    %v1518 = vpop.xlane.xlu0 %1517
    %1519 = vadd.xlane.f32.xlu0 %v1456
    %v1520 = vpop.xlane.xlu0 %1519
    %1521 = vadd.xlane.f32.xlu0 %v1458
    %v1522 = vpop.xlane.xlu0 %1521
    %1523 = vadd.xlane.f32.xlu0 %v1460
    %v1524 = vpop.xlane.xlu0 %1523
    %1525 = vadd.xlane.f32.xlu0 %v1462
    %v1526 = vpop.xlane.xlu0 %1525
    %1527 = vadd.xlane.f32.xlu0 %v1464
    %v1528 = vpop.xlane.xlu0 %1527
    %1529 = vadd.xlane.f32.xlu0 %v1466
    %v1530 = vpop.xlane.xlu0 %1529
    %1531 = vadd.xlane.f32.xlu0 %v1468
    %v1532 = vpop.xlane.xlu0 %1531
    %1533 = vadd.xlane.f32.xlu0 %v1470
    %v1534 = vpop.xlane.xlu0 %1533
    %1535 = vadd.xlane.f32.xlu0 %v1472
    %v1536 = vpop.xlane.xlu0 %1535
    %1537 = vadd.xlane.f32.xlu0 %v1474
    %v1538 = vpop.xlane.xlu0 %1537
    %1539 = vadd.xlane.f32.xlu0 %v1476
    %v1540 = vpop.xlane.xlu0 %1539
    %1541 = vadd.xlane.f32.xlu0 %v1478
    %v1542 = vpop.xlane.xlu0 %1541
    %1543 = vadd.xlane.f32.xlu0 %v1480
    %v1544 = vpop.xlane.xlu0 %1543
    %1545 = vadd.xlane.f32.xlu0 %v1482
    %v1546 = vpop.xlane.xlu0 %1545
    %1547 = vadd.xlane.f32.xlu0 %v1484
    %v1548 = vpop.xlane.xlu0 %1547
    %1549 = vadd.xlane.f32.xlu0 %v1486
    %v1550 = vpop.xlane.xlu0 %1549
    %1551 = vadd.xlane.f32.xlu0 %v1488
    %v1552 = vpop.xlane.xlu0 %1551
    %1553 = vadd.xlane.f32.xlu0 %v1490
    %v1554 = vpop.xlane.xlu0 %1553
    %1555 = vadd.xlane.f32.xlu0 %v1492
    %v1556 = vpop.xlane.xlu0 %1555
    %1557 = vadd.xlane.f32.xlu0 %v1494
    %v1558 = vpop.xlane.xlu0 %1557
    %1559 = vadd.xlane.f32.xlu0 %v1496
    %v1560 = vpop.xlane.xlu0 %1559
    %1561 = vadd.xlane.f32.xlu0 %v1498
    %v1562 = vpop.xlane.xlu0 %1561
    %1563 = vadd.xlane.f32.xlu0 %v1500
    %v1564 = vpop.xlane.xlu0 %1563
    %1565 = vadd.xlane.f32.xlu0 %v1502
    %v1566 = vpop.xlane.xlu0 %1565
    %1567 = vadd.xlane.f32.xlu0 %v1504
    %v1568 = vpop.xlane.xlu0 %1567
    %v1569 = vrcp.pop %v1506
    %v1570 = vrcp.pop %v1508
    %v1571 = vrcp.pop %v1510
    %v1572 = vrcp.pop %v1512
    %v1573 = vrcp.pop %v1514
    %v1574 = vrcp.pop %v1516
    %v1575 = vrcp.pop %v1518
    %v1576 = vrcp.pop %v1520
    %v1577 = vrcp.pop %v1522
    %v1578 = vrcp.pop %v1524
    %v1579 = vrcp.pop %v1526
    %v1580 = vrcp.pop %v1528
    %v1581 = vrcp.pop %v1530
    %v1582 = vrcp.pop %v1532
    %v1583 = vrcp.pop %v1534
    %v1584 = vrcp.pop %v1536
    %v1585 = vrcp.pop %v1538
    %v1586 = vrcp.pop %v1540
    %v1587 = vrcp.pop %v1542
    %v1588 = vrcp.pop %v1544
    %v1589 = vrcp.pop %v1546
    %v1590 = vrcp.pop %v1548
    %v1591 = vrcp.pop %v1550
    %v1592 = vrcp.pop %v1552
    %v1593 = vrcp.pop %v1554
    %v1594 = vrcp.pop %v1556
    %v1595 = vrcp.pop %v1558
    %v1596 = vrcp.pop %v1560
    %v1597 = vrcp.pop %v1562
    %v1598 = vrcp.pop %v1564
    %v1599 = vrcp.pop %v1566
    %v1600 = vrcp.pop %v1568
    %v1601 = vmul.f32 %v1442, %v1569
    %v1602 = vmul.f32 %v1444, %v1570
    %v1603 = vmul.f32 %v1446, %v1571
    %v1604 = vmul.f32 %v1448, %v1572
    %v1605 = vmul.f32 %v1450, %v1573
    %v1606 = vmul.f32 %v1452, %v1574
    %v1607 = vmul.f32 %v1454, %v1575
    %v1608 = vmul.f32 %v1456, %v1576
    %v1609 = vmul.f32 %v1458, %v1577
    %v1610 = vmul.f32 %v1460, %v1578
    %v1611 = vmul.f32 %v1462, %v1579
    %v1612 = vmul.f32 %v1464, %v1580
    %v1613 = vmul.f32 %v1466, %v1581
    %v1614 = vmul.f32 %v1468, %v1582
    %v1615 = vmul.f32 %v1470, %v1583
    %v1616 = vmul.f32 %v1472, %v1584
    %v1617 = vmul.f32 %v1474, %v1585
    %v1618 = vmul.f32 %v1476, %v1586
    %v1619 = vmul.f32 %v1478, %v1587
    %v1620 = vmul.f32 %v1480, %v1588
    %v1621 = vmul.f32 %v1482, %v1589
    %v1622 = vmul.f32 %v1484, %v1590
    %v1623 = vmul.f32 %v1486, %v1591
    %v1624 = vmul.f32 %v1488, %v1592
    %v1625 = vmul.f32 %v1490, %v1593
    %v1626 = vmul.f32 %v1492, %v1594
    %v1627 = vmul.f32 %v1494, %v1595
    %v1628 = vmul.f32 %v1496, %v1596
    %v1629 = vmul.f32 %v1498, %v1597
    %v1630 = vmul.f32 %v1500, %v1598
    %v1631 = vmul.f32 %v1502, %v1599
    %v1632 = vmul.f32 %v1504, %v1600
    %v1633 = vmax.f32 %v1601, %v1605
    %v1634 = vmax.f32 %v1602, %v1606
    %v1635 = vmax.f32 %v1603, %v1607
    %v1636 = vmax.f32 %v1604, %v1608
    %v1637 = vmax.f32 %v1633, %v1609
    %v1638 = vmax.f32 %v1634, %v1610
    %v1639 = vmax.f32 %v1635, %v1611
    %v1640 = vmax.f32 %v1636, %v1612
    %v1641 = vmax.f32 %v1637, %v1613
    %v1642 = vmax.f32 %v1638, %v1614
    %v1643 = vmax.f32 %v1639, %v1615
    %v1644 = vmax.f32 %v1640, %v1616
    %v1645 = vmax.f32 %v1641, %v1617
    %v1646 = vmax.f32 %v1642, %v1618
    %v1647 = vmax.f32 %v1643, %v1619
    %v1648 = vmax.f32 %v1644, %v1620
    %v1649 = vmax.f32 %v1645, %v1621
    %v1650 = vmax.f32 %v1646, %v1622
    %v1651 = vmax.f32 %v1647, %v1623
    %v1652 = vmax.f32 %v1648, %v1624
    %v1653 = vmax.f32 %v1649, %v1625
    %v1654 = vmax.f32 %v1650, %v1626
    %v1655 = vmax.f32 %v1651, %v1627
    %v1656 = vmax.f32 %v1652, %v1628
    %v1657 = vmax.f32 %v1653, %v1629
    %v1658 = vmax.f32 %v1654, %v1630
    %v1659 = vmax.f32 %v1655, %v1631
    %v1660 = vmax.f32 %v1656, %v1632
    %v1661 = vmax.f32 %v1657, %v1658
    %v1662 = vmax.f32 %v1659, %v1660
    %v1663 = vmax.f32 %v1661, %v1662
    %v1664 = vrot.slane %v1663, 4
    %v1665 = vmax.f32 %v1663, %v1664
    %v1666 = vrot.slane %v1665, 2
    %v1667 = vmax.f32 %v1665, %v1666
    %v1668 = vrot.slane %v1667, 1
    %v1669 = vmax.f32 %v1667, %v1668
    %1670 = vst [vmem:[#allocation2 + $0x1] sm:$0x1] %v1669
    // Predicated region
    $region22: #{pipnet_prototype_wrapper.1} parent=1 // pred_check
      _
    $region23: #{pipnet_prototype_wrapper.1} parent=1 // pred_check_branch
      %1672 = sbr.rel (0) target = $region25
    $region24: #{pipnet_prototype_wrapper.1} parent=1 // pred_region
      %s1674 = ssub.s32 32, 32
      %1675 = vsyncadd [#allocation3], %s1674
      %s1677 = sshll.u32 [#allocation2], 4
      %s1678 = int_to_ptr.vmem [resolvable:$true] %s1677
      %1680 = dma.vmem_to_hbm [thread:$0]  %s1678, 32, %s5, [#allocation3]
    $region25: #{pipnet_prototype_wrapper.1} parent=1 // pred_fallthru
      _
    // Predicated region
    $region26: #{pipnet_prototype_wrapper.1} parent=1 // pred_check
      _
    $region27: #{pipnet_prototype_wrapper.1} parent=1 // pred_check_branch
      %1682 = sbr.rel (0) target = $region29
    $region28: #{pipnet_prototype_wrapper.1} parent=1 // pred_region
      %1683 = dma.done [#allocation3], 32
    $region29: #{pipnet_prototype_wrapper.1} parent=1 // pred_fallthru
      _
    %1684 = vsyncpa [#allocation3], 1

</llo_original>
